<compile_context>
chip_gen: v7x
topology: tpu7x:2x2x1
jax: 0.10.0
libtpu: 0.0.40
codegen_flags: <defaults>
</compile_context>

<pallas_src>
import functools

import jax
import jax.numpy as jnp
from jax.experimental import pallas as pl
from jax.experimental.pallas import tpu as pltpu


# ----------------------------- Pallas kernels ------------------------------

def conv_stats_kernel(w_ref, x_ref, mask_ref, conv_ref, sum_ref, sq_ref,
                      *, tap_offsets):
    """One sample: shifted-slab conv + per-channel partial BN sums.

    w_ref:    (T, C_out, C_in)   per-tap weight matrices (T = KH*KW)
    x_ref:    (C_in, Lp)         flattened zero-padded sample (+KW-1 tail pad)
    mask_ref: (1, Lc)            1.0 on valid output columns, 0.0 on wrap cols
    conv_ref: (C_out, Lc)        conv output on the padded-width grid
    sum_ref:  (C_out, 1)         per-sample sum over valid columns
    sq_ref:   (C_out, 1)         per-sample sum of squares over valid columns
    """
    lc = conv_ref.shape[-1]
    acc = None
    for t, off in enumerate(tap_offsets):          # static unroll, T = KH*KW
        xs = x_ref[:, off:off + lc]                # shifted slab (C_in, Lc)
        part = jnp.dot(w_ref[t], xs, preferred_element_type=jnp.float32)
        acc = part if acc is None else acc + part
    conv_ref[...] = acc

    m = mask_ref[...]                              # (1, Lc) valid-column mask
    sum_ref[...] = jnp.sum(acc * m, axis=1, keepdims=True)
    sq_ref[...] = jnp.sum(acc * acc * m, axis=1, keepdims=True)


def bn_relu_kernel(conv_ref, scale_ref, shift_ref, o_ref):
    """One sample: y = max(conv * scale + shift, 0).  scale/shift precomputed."""
    y = conv_ref[...] * scale_ref[...] + shift_ref[...]
    o_ref[...] = jnp.maximum(y, 0.0).astype(o_ref.dtype)


# ------------------------------- wrapper ------------------------------------

def conv_bn_relu(x_nchw, weight, *, padding, eps=1e-5, use_bf16=None):
    """x_nchw: [N, C_in, H, W]; weight: [C_out, C_in, KH, KW].

    The Conv2d bias is intentionally not an argument: the fresh training-mode
    BatchNorm2d subtracts the per-channel batch mean, cancelling it exactly.
    """
    N, C_in, H, W = x_nchw.shape
    C_out, _, KH, KW = weight.shape
    p = padding
    H_pad, W_pad = H + 2 * p, W + 2 * p
    H_out, W_out = H_pad - KH + 1, W_pad - KW + 1
    T = KH * KW
    Lc = H_out * W_pad                 # conv output on padded-width grid
    Lp = H_pad * W_pad + (KW - 1)      # flattened padded input + tail pad
    M_true = N * H_out * W_out

    # bf16 MXU operands only at real channel widths; toy stays f32 end-to-end.
    if use_bf16 is None:
        use_bf16 = C_in >= 64
    in_dt = jnp.bfloat16 if use_bf16 else jnp.float32

    # ---- layout prep (cheap: ~1.3x input bytes, no transposes) ----
    x_pad = jnp.pad(x_nchw.astype(jnp.float32),
                    ((0, 0), (0, 0), (p, p), (p, p)))
    x_flat = x_pad.reshape(N, C_in, H_pad * W_pad)
    x_flat = jnp.pad(x_flat, ((0, 0), (0, 0), (0, KW - 1))).astype(in_dt)

    # weight -> (T, C_out, C_in): w_taps[dh*KW+dw, co, ci] = weight[co, ci, dh, dw]
    w_taps = jnp.transpose(weight.astype(jnp.float32),
                           (2, 3, 0, 1)).reshape(T, C_out, C_in).astype(in_dt)

    # valid-column mask on the padded-width grid (wrap columns excluded)
    cols = jnp.arange(Lc, dtype=jnp.int32) % W_pad
    mask = (cols < W_out).astype(jnp.float32).reshape(1, Lc)

    tap_offsets = tuple(dh * W_pad + dw for dh in range(KH) for dw in range(KW))

    # ---- generation-aware VMEM budget ----
    bytes_in = 2 if use_bf16 else 4
    per_step = (T * C_out * C_in * bytes_in      # weights (grid-invariant)
                + 2 * C_in * Lp * bytes_in       # input slab, double-buffered
                + 2 * Lc * 4                     # mask
                + 4 * C_out * Lc * 4             # conv block + acc, buffered
                + 4 * C_out * 8)                 # sum / sq
    try:
        vmem_cap = int(getattr(pltpu.get_tpu_info(), "vmem_capacity_bytes",
                               64 * 1024 * 1024))
    except Exception:
        vmem_cap = 64 * 1024 * 1024
    vmem_limit = int(min(vmem_cap * 3 // 4, max(16 << 20, 4 * per_step)))

    cparams = pltpu.CompilerParams(dimension_semantics=("parallel",),
                                   vmem_limit_bytes=vmem_limit)

    # ---- pass 1: conv + per-sample BN partial sums (batch-parallel grid) ----
    conv_pad, ps_sum, ps_sq = pl.pallas_call(
        functools.partial(conv_stats_kernel, tap_offsets=tap_offsets),
        out_shape=(
            jax.ShapeDtypeStruct((N, C_out, Lc), jnp.float32),
            jax.ShapeDtypeStruct((N, C_out, 1), jnp.float32),
            jax.ShapeDtypeStruct((N, C_out, 1), jnp.float32),
        ),
        grid=(N,),
        in_specs=[
            pl.BlockSpec((T, C_out, C_in), lambda n: (0, 0, 0)),
            pl.BlockSpec((pl.Squeezed(), C_in, Lp), lambda n: (n, 0, 0)),
            pl.BlockSpec((1, Lc), lambda n: (0, 0)),
        ],
        out_specs=(
            pl.BlockSpec((pl.Squeezed(), C_out, Lc), lambda n: (n, 0, 0)),
            pl.BlockSpec((pl.Squeezed(), C_out, 1), lambda n: (n, 0, 0)),
            pl.BlockSpec((pl.Squeezed(), C_out, 1), lambda n: (n, 0, 0)),
        ),
        compiler_params=cparams,
    )(w_taps, x_flat, mask)

    # ---- BN finalize, hoisted out of pass 2 (tiny (C_out,1) ops) ----
    ch_sum = jnp.sum(ps_sum, axis=0)                       # (C_out, 1)
    ch_sq = jnp.sum(ps_sq, axis=0)                         # (C_out, 1)
    mean = ch_sum * (1.0 / M_true)
    var = jnp.maximum(ch_sq * (1.0 / M_true) - mean * mean, 0.0)
    inv_std = jax.lax.rsqrt(var + eps)
    scale = inv_std                                        # gamma = 1
    shift = -mean * inv_std                                # beta = 0

    # ---- pass 2: normalize + ReLU (output aliased onto the conv buffer) ----
    out_pad = pl.pallas_call(
        bn_relu_kernel,
        out_shape=jax.ShapeDtypeStruct((N, C_out, Lc), jnp.float32),
        grid=(N,),
        in_specs=[
            pl.BlockSpec((pl.Squeezed(), C_out, Lc), lambda n: (n, 0, 0)),
            pl.BlockSpec((C_out, 1), lambda n: (0, 0)),
            pl.BlockSpec((C_out, 1), lambda n: (0, 0)),
        ],
        out_specs=pl.BlockSpec((pl.Squeezed(), C_out, Lc), lambda n: (n, 0, 0)),
        input_output_aliases={0: 0},
        compiler_params=cparams,
    )(conv_pad, scale, shift)

    # Drop the KW-1 wrap-around columns; reshape to NCHW is free (no transpose).
    out = out_pad.reshape(N, C_out, H_out, W_pad)[:, :, :, :W_out]
    return out


# ------------------------------ reference -----------------------------------

def conv_bn_relu_ref(x_nchw, weight, bias, *, padding, eps=1e-5):
    conv = jax.lax.conv_general_dilated(
        x_nchw.astype(jnp.float32), weight.astype(jnp.float32),
        window_strides=(1, 1), padding=[(padding, padding), (padding, padding)],
        dimension_numbers=("NCHW", "OIHW", "NCHW"),
    ) + bias.reshape(1, -1, 1, 1)
    mean = jnp.mean(conv, axis=(0, 2, 3), keepdims=True)
    var = jnp.mean((conv - mean) ** 2, axis=(0, 2, 3), keepdims=True)
    y = (conv - mean) / jnp.sqrt(var + eps)
    return jnp.maximum(y, 0.0)


# -------------------------------- main ---------------------------------------

if __name__ == "__main__":
    # Module config: Conv(inp=4, oup=8, kernel=3, padding=1)
    inp, oup, kernel, padding = 4, 8, 3, 1
    N, H, W = 2, 16, 16

    key = jax.random.PRNGKey(0)
    kx, kw, kb = jax.random.split(key, 3)

    x = jax.random.normal(kx, (N, inp, H, W), dtype=jnp.float32)

    # Deterministic parameter init (kaiming-uniform-like bounds, as nn.Conv2d)
    fan_in = inp * kernel * kernel
    bound = 1.0 / jnp.sqrt(jnp.float32(fan_in))
    weight = jax.random.uniform(kw, (oup, inp, kernel, kernel),
                                minval=-bound, maxval=bound, dtype=jnp.float32)
    bias = jax.random.uniform(kb, (oup,), minval=-bound, maxval=bound,
                              dtype=jnp.float32)

    run_f32 = jax.jit(functools.partial(conv_bn_relu, padding=padding))
    run_bf16 = jax.jit(functools.partial(conv_bn_relu, padding=padding,
                                         use_bf16=True))

    # Reference includes the conv bias; the kernel drops it (cancelled by BN).
    ref = conv_bn_relu_ref(x, weight, bias, padding=padding)

    out = jax.block_until_ready(run_f32(x, weight))
    assert out.shape == (N, oup, H, W), out.shape
    assert jnp.allclose(out, ref, atol=1e-4, rtol=1e-4), \
        float(jnp.max(jnp.abs(out - ref)))

    # Exercise the bf16-operand path too (looser tolerance; f32 accumulation).
    out_bf = jax.block_until_ready(run_bf16(x, weight))
    assert out_bf.shape == (N, oup, H, W), out_bf.shape
    assert jnp.allclose(out_bf, ref, atol=5e-2, rtol=5e-2), \
        float(jnp.max(jnp.abs(out_bf - ref)))

    print("KERNEL_OK")
</pallas_src>

<mosaic_0001>
module attributes {stable_mosaic.version = 11 : i64} {
  func.func @conv_stats_kernel(%arg0: i32, %arg1: memref<9x8x4xf32, #tpu.memory_space<vmem>>, %arg2: memref<1x4x326xf32, #tpu.memory_space<vmem>>, %arg3: memref<1x288xf32, #tpu.memory_space<vmem>>, %arg4: memref<1x8x288xf32, #tpu.memory_space<vmem>>, %arg5: memref<1x8x1xf32, #tpu.memory_space<vmem>>, %arg6: memref<1x8x1xf32, #tpu.memory_space<vmem>>) attributes {dimension_semantics = [#tpu.dimension_semantics<parallel>], iteration_bounds = array<i64: 2>, scalar_prefetch = 0 : i64, scratch_operands = 0 : i64, tpu.core_type = #tpu.core_type<tc>, window_params = [{pipeline_mode = #tpu.pipeline_mode<synchronous>, transform_indices = @transform_0, window_bounds = array<i64: 9, 8, 4>}, {transform_indices = @transform_1, window_bounds = array<i64: 1, 4, 326>}, {pipeline_mode = #tpu.pipeline_mode<synchronous>, transform_indices = @transform_2, window_bounds = array<i64: 1, 288>}, {transform_indices = @transform_3, window_bounds = array<i64: 1, 8, 288>}, {transform_indices = @transform_4, window_bounds = array<i64: 1, 8, 1>}, {transform_indices = @transform_5, window_bounds = array<i64: 1, 8, 1>}]} {
    %c0 = arith.constant 0 : index
    %c0_0 = arith.constant 0 : index
    %c0_1 = arith.constant 0 : index
    %0 = vector.load %arg2[%c0, %c0_0, %c0_1] : memref<1x4x326xf32, #tpu.memory_space<vmem>>, vector<1x4x288xf32>
    %1 = vector.shape_cast %0 : vector<1x4x288xf32> to vector<4x288xf32>
    %c0_2 = arith.constant 0 : index
    %c0_3 = arith.constant 0 : index
    %c0_4 = arith.constant 0 : index
    %2 = vector.load %arg1[%c0_2, %c0_3, %c0_4] : memref<9x8x4xf32, #tpu.memory_space<vmem>>, vector<1x8x4xf32>
    %3 = vector.shape_cast %2 : vector<1x8x4xf32> to vector<8x4xf32>
    %cst = arith.constant dense<0.000000e+00> : vector<8x288xf32>
    %4 = tpu.matmul %3, %1, %cst {dimension_numbers = #tpu.dot_dimension_numbers<[1], [0], [0], [1], [0, 0, 1, 1], [], []>} : vector<8x4xf32>, vector<4x288xf32>, vector<8x288xf32> -> vector<8x288xf32>
    %c0_5 = arith.constant 0 : index
    %c0_6 = arith.constant 0 : index
    %c1 = arith.constant 1 : index
    %5 = vector.load %arg2[%c0_5, %c0_6, %c1] : memref<1x4x326xf32, #tpu.memory_space<vmem>>, vector<1x4x288xf32>
    %6 = vector.shape_cast %5 : vector<1x4x288xf32> to vector<4x288xf32>
    %c1_7 = arith.constant 1 : index
    %c0_8 = arith.constant 0 : index
    %c0_9 = arith.constant 0 : index
    %7 = vector.load %arg1[%c1_7, %c0_8, %c0_9] : memref<9x8x4xf32, #tpu.memory_space<vmem>>, vector<1x8x4xf32>
    %8 = vector.shape_cast %7 : vector<1x8x4xf32> to vector<8x4xf32>
    %cst_10 = arith.constant dense<0.000000e+00> : vector<8x288xf32>
    %9 = tpu.matmul %8, %6, %cst_10 {dimension_numbers = #tpu.dot_dimension_numbers<[1], [0], [0], [1], [0, 0, 1, 1], [], []>} : vector<8x4xf32>, vector<4x288xf32>, vector<8x288xf32> -> vector<8x288xf32>
    %10 = arith.addf %4, %9 : vector<8x288xf32>
    %c0_11 = arith.constant 0 : index
    %c0_12 = arith.constant 0 : index
    %c2 = arith.constant 2 : index
    %11 = vector.load %arg2[%c0_11, %c0_12, %c2] : memref<1x4x326xf32, #tpu.memory_space<vmem>>, vector<1x4x288xf32>
    %12 = vector.shape_cast %11 : vector<1x4x288xf32> to vector<4x288xf32>
    %c2_13 = arith.constant 2 : index
    %c0_14 = arith.constant 0 : index
    %c0_15 = arith.constant 0 : index
    %13 = vector.load %arg1[%c2_13, %c0_14, %c0_15] : memref<9x8x4xf32, #tpu.memory_space<vmem>>, vector<1x8x4xf32>
    %14 = vector.shape_cast %13 : vector<1x8x4xf32> to vector<8x4xf32>
    %cst_16 = arith.constant dense<0.000000e+00> : vector<8x288xf32>
    %15 = tpu.matmul %14, %12, %cst_16 {dimension_numbers = #tpu.dot_dimension_numbers<[1], [0], [0], [1], [0, 0, 1, 1], [], []>} : vector<8x4xf32>, vector<4x288xf32>, vector<8x288xf32> -> vector<8x288xf32>
    %16 = arith.addf %10, %15 : vector<8x288xf32>
    %c0_17 = arith.constant 0 : index
    %c0_18 = arith.constant 0 : index
    %c18 = arith.constant 18 : index
    %17 = vector.load %arg2[%c0_17, %c0_18, %c18] : memref<1x4x326xf32, #tpu.memory_space<vmem>>, vector<1x4x288xf32>
    %18 = vector.shape_cast %17 : vector<1x4x288xf32> to vector<4x288xf32>
    %c3 = arith.constant 3 : index
    %c0_19 = arith.constant 0 : index
    %c0_20 = arith.constant 0 : index
    %19 = vector.load %arg1[%c3, %c0_19, %c0_20] : memref<9x8x4xf32, #tpu.memory_space<vmem>>, vector<1x8x4xf32>
    %20 = vector.shape_cast %19 : vector<1x8x4xf32> to vector<8x4xf32>
    %cst_21 = arith.constant dense<0.000000e+00> : vector<8x288xf32>
    %21 = tpu.matmul %20, %18, %cst_21 {dimension_numbers = #tpu.dot_dimension_numbers<[1], [0], [0], [1], [0, 0, 1, 1], [], []>} : vector<8x4xf32>, vector<4x288xf32>, vector<8x288xf32> -> vector<8x288xf32>
    %22 = arith.addf %16, %21 : vector<8x288xf32>
    %c0_22 = arith.constant 0 : index
    %c0_23 = arith.constant 0 : index
    %c19 = arith.constant 19 : index
    %23 = vector.load %arg2[%c0_22, %c0_23, %c19] : memref<1x4x326xf32, #tpu.memory_space<vmem>>, vector<1x4x288xf32>
    %24 = vector.shape_cast %23 : vector<1x4x288xf32> to vector<4x288xf32>
    %c4 = arith.constant 4 : index
    %c0_24 = arith.constant 0 : index
    %c0_25 = arith.constant 0 : index
    %25 = vector.load %arg1[%c4, %c0_24, %c0_25] : memref<9x8x4xf32, #tpu.memory_space<vmem>>, vector<1x8x4xf32>
    %26 = vector.shape_cast %25 : vector<1x8x4xf32> to vector<8x4xf32>
    %cst_26 = arith.constant dense<0.000000e+00> : vector<8x288xf32>
    %27 = tpu.matmul %26, %24, %cst_26 {dimension_numbers = #tpu.dot_dimension_numbers<[1], [0], [0], [1], [0, 0, 1, 1], [], []>} : vector<8x4xf32>, vector<4x288xf32>, vector<8x288xf32> -> vector<8x288xf32>
    %28 = arith.addf %22, %27 : vector<8x288xf32>
    %c0_27 = arith.constant 0 : index
    %c0_28 = arith.constant 0 : index
    %c20 = arith.constant 20 : index
    %29 = vector.load %arg2[%c0_27, %c0_28, %c20] : memref<1x4x326xf32, #tpu.memory_space<vmem>>, vector<1x4x288xf32>
    %30 = vector.shape_cast %29 : vector<1x4x288xf32> to vector<4x288xf32>
    %c5 = arith.constant 5 : index
    %c0_29 = arith.constant 0 : index
    %c0_30 = arith.constant 0 : index
    %31 = vector.load %arg1[%c5, %c0_29, %c0_30] : memref<9x8x4xf32, #tpu.memory_space<vmem>>, vector<1x8x4xf32>
    %32 = vector.shape_cast %31 : vector<1x8x4xf32> to vector<8x4xf32>
    %cst_31 = arith.constant dense<0.000000e+00> : vector<8x288xf32>
    %33 = tpu.matmul %32, %30, %cst_31 {dimension_numbers = #tpu.dot_dimension_numbers<[1], [0], [0], [1], [0, 0, 1, 1], [], []>} : vector<8x4xf32>, vector<4x288xf32>, vector<8x288xf32> -> vector<8x288xf32>
    %34 = arith.addf %28, %33 : vector<8x288xf32>
    %c0_32 = arith.constant 0 : index
    %c0_33 = arith.constant 0 : index
    %c36 = arith.constant 36 : index
    %35 = vector.load %arg2[%c0_32, %c0_33, %c36] : memref<1x4x326xf32, #tpu.memory_space<vmem>>, vector<1x4x288xf32>
    %36 = vector.shape_cast %35 : vector<1x4x288xf32> to vector<4x288xf32>
    %c6 = arith.constant 6 : index
    %c0_34 = arith.constant 0 : index
    %c0_35 = arith.constant 0 : index
    %37 = vector.load %arg1[%c6, %c0_34, %c0_35] : memref<9x8x4xf32, #tpu.memory_space<vmem>>, vector<1x8x4xf32>
    %38 = vector.shape_cast %37 : vector<1x8x4xf32> to vector<8x4xf32>
    %cst_36 = arith.constant dense<0.000000e+00> : vector<8x288xf32>
    %39 = tpu.matmul %38, %36, %cst_36 {dimension_numbers = #tpu.dot_dimension_numbers<[1], [0], [0], [1], [0, 0, 1, 1], [], []>} : vector<8x4xf32>, vector<4x288xf32>, vector<8x288xf32> -> vector<8x288xf32>
    %40 = arith.addf %34, %39 : vector<8x288xf32>
    %c0_37 = arith.constant 0 : index
    %c0_38 = arith.constant 0 : index
    %c37 = arith.constant 37 : index
    %41 = vector.load %arg2[%c0_37, %c0_38, %c37] : memref<1x4x326xf32, #tpu.memory_space<vmem>>, vector<1x4x288xf32>
    %42 = vector.shape_cast %41 : vector<1x4x288xf32> to vector<4x288xf32>
    %c7 = arith.constant 7 : index
    %c0_39 = arith.constant 0 : index
    %c0_40 = arith.constant 0 : index
    %43 = vector.load %arg1[%c7, %c0_39, %c0_40] : memref<9x8x4xf32, #tpu.memory_space<vmem>>, vector<1x8x4xf32>
    %44 = vector.shape_cast %43 : vector<1x8x4xf32> to vector<8x4xf32>
    %cst_41 = arith.constant dense<0.000000e+00> : vector<8x288xf32>
    %45 = tpu.matmul %44, %42, %cst_41 {dimension_numbers = #tpu.dot_dimension_numbers<[1], [0], [0], [1], [0, 0, 1, 1], [], []>} : vector<8x4xf32>, vector<4x288xf32>, vector<8x288xf32> -> vector<8x288xf32>
    %46 = arith.addf %40, %45 : vector<8x288xf32>
    %c0_42 = arith.constant 0 : index
    %c0_43 = arith.constant 0 : index
    %c38 = arith.constant 38 : index
    %47 = vector.load %arg2[%c0_42, %c0_43, %c38] : memref<1x4x326xf32, #tpu.memory_space<vmem>>, vector<1x4x288xf32>
    %48 = vector.shape_cast %47 : vector<1x4x288xf32> to vector<4x288xf32>
    %c8 = arith.constant 8 : index
    %c0_44 = arith.constant 0 : index
    %c0_45 = arith.constant 0 : index
    %49 = vector.load %arg1[%c8, %c0_44, %c0_45] : memref<9x8x4xf32, #tpu.memory_space<vmem>>, vector<1x8x4xf32>
    %50 = vector.shape_cast %49 : vector<1x8x4xf32> to vector<8x4xf32>
    %cst_46 = arith.constant dense<0.000000e+00> : vector<8x288xf32>
    %51 = tpu.matmul %50, %48, %cst_46 {dimension_numbers = #tpu.dot_dimension_numbers<[1], [0], [0], [1], [0, 0, 1, 1], [], []>} : vector<8x4xf32>, vector<4x288xf32>, vector<8x288xf32> -> vector<8x288xf32>
    %52 = arith.addf %46, %51 : vector<8x288xf32>
    %c0_47 = arith.constant 0 : index
    %c0_48 = arith.constant 0 : index
    %c0_49 = arith.constant 0 : index
    %53 = vector.load %arg4[%c0_47, %c0_48, %c0_49] : memref<1x8x288xf32, #tpu.memory_space<vmem>>, vector<1x8x288xf32>
    %54 = vector.shape_cast %53 : vector<1x8x288xf32> to vector<8x288xf32>
    %55 = vector.shape_cast %52 : vector<8x288xf32> to vector<1x8x288xf32>
    tpu.vector_store %arg4[%c0_47, %c0_48, %c0_49], %55 {strides = array<i32>} : memref<1x8x288xf32, #tpu.memory_space<vmem>>, vector<1x8x288xf32>,
    %c0_50 = arith.constant 0 : index
    %c0_51 = arith.constant 0 : index
    %56 = vector.load %arg3[%c0_50, %c0_51] : memref<1x288xf32, #tpu.memory_space<vmem>>, vector<1x288xf32>
    %57 = vector.broadcast %56 : vector<1x288xf32> to vector<8x288xf32>
    %58 = arith.mulf %52, %57 : vector<8x288xf32>
    %cst_52 = arith.constant dense<0.000000e+00> : vector<8xf32>
    %59 = vector.multi_reduction <add>, %58, %cst_52 [1] : vector<8x288xf32> to vector<8xf32>
    %60 = vector.shape_cast %59 : vector<8xf32> to vector<8x1xf32>
    %c0_53 = arith.constant 0 : index
    %c0_54 = arith.constant 0 : index
    %c0_55 = arith.constant 0 : index
    %61 = vector.load %arg5[%c0_53, %c0_54, %c0_55] : memref<1x8x1xf32, #tpu.memory_space<vmem>>, vector<1x8x1xf32>
    %62 = vector.shape_cast %61 : vector<1x8x1xf32> to vector<8x1xf32>
    %63 = vector.shape_cast %60 : vector<8x1xf32> to vector<1x8x1xf32>
    tpu.vector_store %arg5[%c0_53, %c0_54, %c0_55], %63 {strides = array<i32>} : memref<1x8x1xf32, #tpu.memory_space<vmem>>, vector<1x8x1xf32>,
    %64 = arith.mulf %52, %52 : vector<8x288xf32>
    %65 = vector.broadcast %56 : vector<1x288xf32> to vector<8x288xf32>
    %66 = arith.mulf %64, %65 : vector<8x288xf32>
    %cst_56 = arith.constant dense<0.000000e+00> : vector<8xf32>
    %67 = vector.multi_reduction <add>, %66, %cst_56 [1] : vector<8x288xf32> to vector<8xf32>
    %68 = vector.shape_cast %67 : vector<8xf32> to vector<8x1xf32>
    %c0_57 = arith.constant 0 : index
    %c0_58 = arith.constant 0 : index
    %c0_59 = arith.constant 0 : index
    %69 = vector.load %arg6[%c0_57, %c0_58, %c0_59] : memref<1x8x1xf32, #tpu.memory_space<vmem>>, vector<1x8x1xf32>
    %70 = vector.shape_cast %69 : vector<1x8x1xf32> to vector<8x1xf32>
    %71 = vector.shape_cast %68 : vector<8x1xf32> to vector<1x8x1xf32>
    tpu.vector_store %arg6[%c0_57, %c0_58, %c0_59], %71 {strides = array<i32>} : memref<1x8x1xf32, #tpu.memory_space<vmem>>, vector<1x8x1xf32>,
    return
  }
  func.func @transform_0(%arg0: i32) -> (i32, i32, i32) {
    %c0_i32 = arith.constant 0 : i32
    %c0_i32_0 = arith.constant 0 : i32
    %c0_i32_1 = arith.constant 0 : i32
    %c0_i32_2 = arith.constant 0 : i32
    return %c0_i32, %c0_i32_0, %c0_i32_1 : i32, i32, i32
  }
  func.func @transform_1(%arg0: i32) -> (i32, i32, i32) {
    %c0_i32 = arith.constant 0 : i32
    %c0_i32_0 = arith.constant 0 : i32
    %c0_i32_1 = arith.constant 0 : i32
    return %arg0, %c0_i32, %c0_i32_0 : i32, i32, i32
  }
  func.func @transform_2(%arg0: i32) -> (i32, i32) {
    %c0_i32 = arith.constant 0 : i32
    %c0_i32_0 = arith.constant 0 : i32
    %c0_i32_1 = arith.constant 0 : i32
    return %c0_i32, %c0_i32_0 : i32, i32
  }
  func.func @transform_3(%arg0: i32) -> (i32, i32, i32) {
    %c0_i32 = arith.constant 0 : i32
    %c0_i32_0 = arith.constant 0 : i32
    %c0_i32_1 = arith.constant 0 : i32
    return %arg0, %c0_i32, %c0_i32_0 : i32, i32, i32
  }
  func.func @transform_4(%arg0: i32) -> (i32, i32, i32) {
    %c0_i32 = arith.constant 0 : i32
    %c0_i32_0 = arith.constant 0 : i32
    %c0_i32_1 = arith.constant 0 : i32
    return %arg0, %c0_i32, %c0_i32_0 : i32, i32, i32
  }
  func.func @transform_5(%arg0: i32) -> (i32, i32, i32) {
    %c0_i32 = arith.constant 0 : i32
    %c0_i32_0 = arith.constant 0 : i32
    %c0_i32_1 = arith.constant 0 : i32
    return %arg0, %c0_i32, %c0_i32_0 : i32, i32, i32
  }
}

module attributes {stable_mosaic.version = 11 : i64} {
  func.func @bn_relu_kernel(%arg0: i32, %arg1: memref<1x8x288xf32, #tpu.memory_space<vmem>>, %arg2: memref<8x1xf32, #tpu.memory_space<vmem>>, %arg3: memref<8x1xf32, #tpu.memory_space<vmem>>, %arg4: memref<1x8x288xf32, #tpu.memory_space<vmem>>) attributes {dimension_semantics = [#tpu.dimension_semantics<parallel>], iteration_bounds = array<i64: 2>, scalar_prefetch = 0 : i64, scratch_operands = 0 : i64, tpu.core_type = #tpu.core_type<tc>, window_params = [{transform_indices = @transform_0, window_bounds = array<i64: 1, 8, 288>}, {pipeline_mode = #tpu.pipeline_mode<synchronous>, transform_indices = @transform_1, window_bounds = array<i64: 8, 1>}, {pipeline_mode = #tpu.pipeline_mode<synchronous>, transform_indices = @transform_2, window_bounds = array<i64: 8, 1>}, {transform_indices = @transform_3, window_bounds = array<i64: 1, 8, 288>}]} {
    %c0 = arith.constant 0 : index
    %c0_0 = arith.constant 0 : index
    %c0_1 = arith.constant 0 : index
    %0 = vector.load %arg1[%c0, %c0_0, %c0_1] : memref<1x8x288xf32, #tpu.memory_space<vmem>>, vector<1x8x288xf32>
    %1 = vector.shape_cast %0 : vector<1x8x288xf32> to vector<8x288xf32>
    %c0_2 = arith.constant 0 : index
    %c0_3 = arith.constant 0 : index
    %2 = vector.load %arg2[%c0_2, %c0_3] : memref<8x1xf32, #tpu.memory_space<vmem>>, vector<8x1xf32>
    %3 = vector.broadcast %2 : vector<8x1xf32> to vector<8x288xf32>
    %4 = arith.mulf %1, %3 : vector<8x288xf32>
    %c0_4 = arith.constant 0 : index
    %c0_5 = arith.constant 0 : index
    %5 = vector.load %arg3[%c0_4, %c0_5] : memref<8x1xf32, #tpu.memory_space<vmem>>, vector<8x1xf32>
    %6 = vector.broadcast %5 : vector<8x1xf32> to vector<8x288xf32>
    %7 = arith.addf %4, %6 : vector<8x288xf32>
    %cst = arith.constant 0.000000e+00 : f32
    %8 = vector.broadcast %cst : f32 to vector<8x288xf32>
    %9 = arith.maximumf %7, %8 : vector<8x288xf32>
    %c0_6 = arith.constant 0 : index
    %c0_7 = arith.constant 0 : index
    %c0_8 = arith.constant 0 : index
    %10 = vector.load %arg4[%c0_6, %c0_7, %c0_8] : memref<1x8x288xf32, #tpu.memory_space<vmem>>, vector<1x8x288xf32>
    %11 = vector.shape_cast %10 : vector<1x8x288xf32> to vector<8x288xf32>
    %12 = vector.shape_cast %9 : vector<8x288xf32> to vector<1x8x288xf32>
    tpu.vector_store %arg4[%c0_6, %c0_7, %c0_8], %12 {strides = array<i32>} : memref<1x8x288xf32, #tpu.memory_space<vmem>>, vector<1x8x288xf32>,
    return
  }
  func.func @transform_0(%arg0: i32) -> (i32, i32, i32) {
    %c0_i32 = arith.constant 0 : i32
    %c0_i32_0 = arith.constant 0 : i32
    %c0_i32_1 = arith.constant 0 : i32
    return %arg0, %c0_i32, %c0_i32_0 : i32, i32, i32
  }
  func.func @transform_1(%arg0: i32) -> (i32, i32) {
    %c0_i32 = arith.constant 0 : i32
    %c0_i32_0 = arith.constant 0 : i32
    %c0_i32_1 = arith.constant 0 : i32
    return %c0_i32, %c0_i32_0 : i32, i32
  }
  func.func @transform_2(%arg0: i32) -> (i32, i32) {
    %c0_i32 = arith.constant 0 : i32
    %c0_i32_0 = arith.constant 0 : i32
    %c0_i32_1 = arith.constant 0 : i32
    return %c0_i32, %c0_i32_0 : i32, i32
  }
  func.func @transform_3(%arg0: i32) -> (i32, i32, i32) {
    %c0_i32 = arith.constant 0 : i32
    %c0_i32_0 = arith.constant 0 : i32
    %c0_i32_1 = arith.constant 0 : i32
    return %arg0, %c0_i32, %c0_i32_0 : i32, i32, i32
  }
}

</mosaic_0001>

<llo_original>
// kernel: mul.47
$region0: #{mul.47}
  #allocation0 [shape = 's32[1]{0}', space=sflag, size = 0x4, scoped, tag = 'scoped memory for mul.47']
  %s0 = inlined_call_operand.vmem [shape: f32[8,1], index: 0, kind: input, shape index: {}]
  %s1 = inlined_call_operand.vmem [shape: f32[8,1], index: 1, kind: input, shape index: {}]
  %s2 = inlined_call_operand.vmem [shape: f32[8,1], index: 2, kind: output, shape index: {}]
  %v3 = vld [vmem:[%s0] sm:$0xff]
  %v4 = vld [vmem:[%s1] sm:$0xff]
  %5 = xla_tuple %v3, %v4
  %6 = xla_tuple %5
  %v7 = vmul.f32 %v3, %v4
  %8 = xla_tuple %v7
  %9 = vst [vmem:[%s2] sm:$0xff] %v7

// kernel: conv_bn_relu.3
$region0: #{conv_bn_relu.3}
  #allocation0 [shape = 'u32[]', space=smem, size = 0x4, offset = 0x4, fixed_abs, tag = 'smem constant byte address 0x4 - core index']
  #allocation1 [shape = 'u32[144,128]{1,0:T(1,128)}', space=vmem, size = 0x12000, scoped, tag = 'internal scratch']
  %s0 = inlined_call_operand.vmem [shape: f32[2,8,288], index: 0, kind: input, shape index: {}, may-alias: {0,3}]
  %s1 = inlined_call_operand.vmem [shape: f32[8,1], index: 1, kind: input, shape index: {}]
  %s2 = inlined_call_operand.vmem [shape: f32[8,1], index: 2, kind: input, shape index: {}]
  %s3 = inlined_call_operand.vmem [shape: f32[2,8,288], index: 3, kind: output, shape index: {}, may-alias: {0,3}]
  %s4 = sld [smem:[#allocation0]]
  $region45: #{conv_bn_relu.3} parent=0
    _
  %s6 = ssub.s32 1, %s4
  %s7 = scalar_select 0, %s6, %s4
  loop: start=0, step=1, limit=4
  $region2: #{conv_bn_relu.3} parent=0 // loop_pre_header
    _
  $region3: #{conv_bn_relu.3} parent=0 // loop_header
    %s9 = sphi 0, %s13
    %p10 = scmp.ge.s32.totalorder %s9, 4
    %s19 = sphi 0, %s21
    %s22 = sphi 0, %s19
    %s23 = sphi 0, %s22
    %s39 = sphi 0, %s23
    %s43 = sphi 0, %s43
    %s45 = sphi 0, %s43
    %s46 = sphi 0, %s45
    %s60 = sphi 0, %s46
    %s64 = sphi 0, %s64
    %s66 = sphi 0, %s64
    %s67 = sphi 0, %s66
    %s81 = sphi 0, %s67
    %s87 = sphi 0, %s89
    %s90 = sphi 0, %s87
    %s91 = sphi 0, %s90
    %s107 = sphi 0, %s91
  $region4: #{conv_bn_relu.3} parent=0 // loop_header_branch
    %12 = sbr.rel (%p10) target = $region8
  $region5: #{conv_bn_relu.3} parent=0 // loop_body
    %s14 = ssub.s32 %s9, 1
    %s15 = ssub.s32 %s9, 2
    %s16 = sadd.s32 %s9, 1
    %s17 = ssub.s32 %s9, %s16
    %p18 = scmp.eq.s32.totalorder %s17, 0
    %s20 = sadd.s32 %s19, 1
    %s21 = scalar_select %p18, %s19, %s20
    %p24 = pneg %p18
    %p25 = scmp.eq.s32.totalorder %s9, 1
    %p26 = por %p24, %p25
    %p27 = scmp.ne.s32.totalorder %s19, %s22
    %p28 = scmp.eq.s32.totalorder %s9, 0
    %p29 = por %p27, %p28
    %p30 = scmp.ne.s32.totalorder %s19, %s22
    %p31 = scmp.eq.s32.totalorder %s14, 1
    %p32 = por %p30, %p31
    %p33 = scmp.ne.s32.totalorder %s22, %s23
    %p34 = scmp.eq.s32.totalorder %s14, 0
    %p35 = por %p33, %p34
    %p36 = scmp.ne.s32.totalorder %s22, %s23
    %p37 = scmp.eq.s32.totalorder %s15, 1
    %p38 = por %p36, %p37
    %p40 = scmp.ne.s32.totalorder %s23, %s39
    %p41 = scmp.eq.s32.totalorder %s15, 0
    %p42 = por %p40, %p41
    %s44 = sadd.s32 %s43, 1
    %p47 = scmp.eq.s32.totalorder %s9, 1
    %p48 = scmp.ne.s32.totalorder %s43, %s45
    %p49 = scmp.eq.s32.totalorder %s9, 0
    %p50 = por %p48, %p49
    %p51 = scmp.ne.s32.totalorder %s43, %s45
    %p52 = scmp.eq.s32.totalorder %s14, 1
    %p53 = por %p51, %p52
    %p54 = scmp.ne.s32.totalorder %s45, %s46
    %p55 = scmp.eq.s32.totalorder %s14, 0
    %p56 = por %p54, %p55
    %p57 = scmp.ne.s32.totalorder %s45, %s46
    %p58 = scmp.eq.s32.totalorder %s15, 1
    %p59 = por %p57, %p58
    %p61 = scmp.ne.s32.totalorder %s46, %s60
    %p62 = scmp.eq.s32.totalorder %s15, 0
    %p63 = por %p61, %p62
    %s65 = sadd.s32 %s64, 1
    %p68 = scmp.eq.s32.totalorder %s9, 1
    %p69 = scmp.ne.s32.totalorder %s64, %s66
    %p70 = scmp.eq.s32.totalorder %s9, 0
    %p71 = por %p69, %p70
    %p72 = scmp.ne.s32.totalorder %s64, %s66
    %p73 = scmp.eq.s32.totalorder %s14, 1
    %p74 = por %p72, %p73
    %p75 = scmp.ne.s32.totalorder %s66, %s67
    %p76 = scmp.eq.s32.totalorder %s14, 0
    %p77 = por %p75, %p76
    %p78 = scmp.ne.s32.totalorder %s66, %s67
    %p79 = scmp.eq.s32.totalorder %s15, 1
    %p80 = por %p78, %p79
    %p82 = scmp.ne.s32.totalorder %s67, %s81
    %p83 = scmp.eq.s32.totalorder %s15, 0
    %p84 = por %p82, %p83
    %s85 = ssub.s32 %s9, %s16
    %p86 = scmp.eq.s32.totalorder %s85, 0
    %s88 = sadd.s32 %s87, 1
    %s89 = scalar_select %p86, %s87, %s88
    %p92 = pneg %p86
    %p93 = scmp.eq.s32.totalorder %s9, 1
    %p94 = por %p92, %p93
    %p95 = scmp.ne.s32.totalorder %s87, %s90
    %p96 = scmp.eq.s32.totalorder %s9, 0
    %p97 = por %p95, %p96
    %p98 = scmp.ne.s32.totalorder %s87, %s90
    %p99 = scmp.eq.s32.totalorder %s14, 1
    %p100 = por %p98, %p99
    %p101 = scmp.ne.s32.totalorder %s90, %s91
    %p102 = scmp.eq.s32.totalorder %s14, 0
    %p103 = por %p101, %p102
    %p104 = scmp.ne.s32.totalorder %s90, %s91
    %p105 = scmp.eq.s32.totalorder %s15, 1
    %p106 = por %p104, %p105
    %p108 = scmp.ne.s32.totalorder %s91, %s107
    %p109 = scmp.eq.s32.totalorder %s15, 0
    %p110 = por %p108, %p109
    %p111 = scmp.le.s32.totalorder 1, %s9
    %p112 = scmp.lt.s32.totalorder %s9, 3
    %p113 = pnand %p111, %p112
    %p114 = pneg %p113
    // Predicated region
    $region9: #{conv_bn_relu.3} parent=5 // pred_check
      _
    $region10: #{conv_bn_relu.3} parent=5 // pred_check_branch
      %116 = sbr.rel (%p113) target = $region12
    $region11: #{conv_bn_relu.3} parent=5 // pred_region
      %s117 = ssub.s32 %s9, 1
      // Predicated region
      $region13: #{conv_bn_relu.3} parent=11 // pred_check
        %p118 = pneg %p56
      $region14: #{conv_bn_relu.3} parent=11 // pred_check_branch
        %120 = sbr.rel (%p118) target = $region16
      $region15: #{conv_bn_relu.3} parent=11 // pred_region
        _
      $region16: #{conv_bn_relu.3} parent=11 // pred_fallthru
        _
      // Predicated region
      $region17: #{conv_bn_relu.3} parent=11 // pred_check
        %p121 = pneg %p77
      $region18: #{conv_bn_relu.3} parent=11 // pred_check_branch
        %123 = sbr.rel (%p121) target = $region20
      $region19: #{conv_bn_relu.3} parent=11 // pred_region
        _
      $region20: #{conv_bn_relu.3} parent=11 // pred_fallthru
        _
    $region12: #{conv_bn_relu.3} parent=5 // pred_fallthru
      _
    %p124 = scmp.lt.s32.totalorder %s9, 2
    // Predicated region
    $region21: #{conv_bn_relu.3} parent=5 // pred_check
      %p125 = pneg %p124
    $region22: #{conv_bn_relu.3} parent=5 // pred_check_branch
      %127 = sbr.rel (%p125) target = $region24
    $region23: #{conv_bn_relu.3} parent=5 // pred_region
      // Predicated region
      $region25: #{conv_bn_relu.3} parent=23 // pred_check
        %p128 = pneg %p29
      $region26: #{conv_bn_relu.3} parent=23 // pred_check_branch
        %130 = sbr.rel (%p128) target = $region28
      $region27: #{conv_bn_relu.3} parent=23 // pred_region
        %p131 = scmp.lt.s32.totalorder %s9, 1
        %s132 = scalar_select %p131, %s9, 1
        %s133 = smul.addr %s132, 3
        %s134 = smul.addr %s133, 8
        %s135 = scalar_lea.vmem %s0, %s134
      $region28: #{conv_bn_relu.3} parent=23 // pred_fallthru
        _
    $region24: #{conv_bn_relu.3} parent=5 // pred_fallthru
      _
    %p136 = scmp.le.s32.totalorder 1, %s9
    %p137 = scmp.lt.s32.totalorder %s9, 3
    %p138 = pnand %p136, %p137
    %p139 = pneg %p138
    // Predicated region
    $region29: #{conv_bn_relu.3} parent=5 // pred_check
      _
    $region30: #{conv_bn_relu.3} parent=5 // pred_check_branch
      %141 = sbr.rel (%p138) target = $region32
    $region31: #{conv_bn_relu.3} parent=5 // pred_region
      %s142 = ssub.s32 %s9, 1
      %p143 = scmp.lt.s32.totalorder %s14, 1
      %s144 = scalar_select %p143, %s14, 1
      %s145 = smul.addr %s144, 3
      %s146 = smul.addr %s145, 8
      %s147 = scalar_lea.vmem %s0, %s146
      %p148 = pneg %p35
      %p149 = pneg %p32
      %p150 = pneg %p56
      %p151 = pneg %p53
      %p152 = pneg %p77
      %p153 = pneg %p74
      %p154 = pneg %p103
      %p155 = pneg %p100
      %p156 = scmp.lt.s32.totalorder %s14, 1
      %s157 = scalar_select %p156, %s14, 1
      %s158 = smul.addr %s157, 3
      %s159 = smul.addr %s158, 8
      %s160 = scalar_lea.vmem %s3, %s159
      %p161 = scmp.lt.s32.totalorder %s14, 1
      %s162 = scalar_select %p161, %s14, 1
      %s163 = smul.addr %s162, 3
      %s164 = smul.addr %s163, 8
      %s165 = scalar_lea.vmem %s0, %s164
      %p166 = scmp.lt.s32.totalorder %s14, 1
      %s167 = scalar_select %p166, %s14, 1
      %s168 = smul.addr %s167, 3
      %s169 = smul.addr %s168, 8
      %s170 = scalar_lea.vmem %s3, %s169
      %v171 = vld [vmem:[%s165] sm:$0xff]
      %v172 = vld [vmem:[%s165 + $0x8] sm:$0xff]
      %v173 = vld [vmem:[%s165 + $0x10] sm:$0xff]
      %v174 = vld [vmem:[%s1] sm:$0xff]
      %176 = vset.pattern.permute.xlu0 0
      %177 = vperm.xlu0 %176, %v174
      %v178 = vpop.permute.xlu0 %177
      %v180 = vmul.f32 %v171, %v178
      %v181 = vmul.f32 %v172, %v178
      %v182 = vmul.f32 %v173, %v178
      %v183 = vld [vmem:[%s2] sm:$0xff]
      %185 = vset.pattern.permute.xlu0 0
      %186 = vperm.xlu0 %185, %v183
      %v187 = vpop.permute.xlu0 %186
      %v189 = vadd.f32 %v180, %v187
      %v190 = vadd.f32 %v181, %v187
      %v191 = vadd.f32 %v182, %v187
      %v192 = vmax.f32 %v189, 0.0
      %v193 = vmax.f32 %v190, 0.0
      %v194 = vmax.f32 %v191, 0.0
      %195 = vst [vmem:[%s170] sm:$0xff] %v192
      %196 = vst [vmem:[%s170 + $0x8] sm:$0xff] %v193
      %vm197 = vcmask 261120
      %198 = vst.msk [vmem:[%s170 + $0x10] sm:$0xff] %vm197, %v194
      %p199 = scmp.lt.s32.totalorder %s14, 1
      %s200 = scalar_select %p199, %s14, 1
      %s201 = smul.addr %s200, 3
      %s202 = smul.addr %s201, 8
      %s203 = scalar_lea.vmem %s3, %s202
      // Predicated region
      $region33: #{conv_bn_relu.3} parent=31 // pred_check
        %p204 = pneg %p100
      $region34: #{conv_bn_relu.3} parent=31 // pred_check_branch
        %206 = sbr.rel (%p204) target = $region36
      $region35: #{conv_bn_relu.3} parent=31 // pred_region
        _
      $region36: #{conv_bn_relu.3} parent=31 // pred_fallthru
        _
    $region32: #{conv_bn_relu.3} parent=5 // pred_fallthru
      _
    %p207 = scmp.le.s32.totalorder 2, %s9
    // Predicated region
    $region37: #{conv_bn_relu.3} parent=5 // pred_check
      %p208 = pneg %p207
    $region38: #{conv_bn_relu.3} parent=5 // pred_check_branch
      %210 = sbr.rel (%p208) target = $region40
    $region39: #{conv_bn_relu.3} parent=5 // pred_region
      %s211 = ssub.s32 %s9, 2
      // Predicated region
      $region41: #{conv_bn_relu.3} parent=39 // pred_check
        %p212 = pneg %p106
      $region42: #{conv_bn_relu.3} parent=39 // pred_check_branch
        %214 = sbr.rel (%p212) target = $region44
      $region43: #{conv_bn_relu.3} parent=39 // pred_region
        %p215 = scmp.lt.s32.totalorder %s15, 1
        %s216 = scalar_select %p215, %s15, 1
        %s217 = smul.addr %s216, 3
        %s218 = smul.addr %s217, 8
        %s219 = scalar_lea.vmem %s3, %s218
      $region44: #{conv_bn_relu.3} parent=39 // pred_fallthru
        _
    $region40: #{conv_bn_relu.3} parent=5 // pred_fallthru
      _
  $region6: #{conv_bn_relu.3} parent=0 // loop_footer
    %s13 = sadd.s32 1, %s9
  $region7: #{conv_bn_relu.3} parent=0 // loop_footer_branch
    %8 = sbr.rel target = $region3
  $region8: #{conv_bn_relu.3} parent=0 // loop_exit
    _

// kernel: conv_bn_relu.2
$region0: #{conv_bn_relu.2}
  #allocation0 [shape = 'u32[]', space=smem, size = 0x4, offset = 0x4, fixed_abs, tag = 'smem constant byte address 0x4 - core index']
  #allocation1 [shape = 'u32[144,128]{1,0:T(1,128)}', space=vmem, size = 0x12000, scoped, tag = 'internal scratch']
  %s0 = inlined_call_operand.vmem [shape: f32[9,8,4], index: 0, kind: input, shape index: {}]
  %s1 = inlined_call_operand.vmem [shape: f32[2,4,326], index: 1, kind: input, shape index: {}]
  %s2 = inlined_call_operand.vmem [shape: f32[1,288], index: 2, kind: input, shape index: {}]
  %s3 = inlined_call_operand.vmem [shape: f32[2,8,288], index: 3, kind: output, shape index: {0}]
  %s4 = inlined_call_operand.vmem [shape: f32[2,8,1], index: 4, kind: output, shape index: {1}]
  %s5 = inlined_call_operand.vmem [shape: f32[2,8,1], index: 5, kind: output, shape index: {2}]
  %6 = xla_tuple %s3, %s4, %s5
  %s7 = sld [smem:[#allocation0]]
  $region61: #{conv_bn_relu.2} parent=0
    _
  %s9 = ssub.s32 1, %s7
  %s10 = scalar_select 0, %s9, %s7
  loop: start=0, step=1, limit=4
  $region2: #{conv_bn_relu.2} parent=0 // loop_pre_header
    _
  $region3: #{conv_bn_relu.2} parent=0 // loop_header
    %s12 = sphi 0, %s16
    %p13 = scmp.ge.s32.totalorder %s12, 4
    %s20 = sphi 0, %s20
    %s22 = sphi 0, %s20
    %s23 = sphi 0, %s22
    %s37 = sphi 0, %s23
    %s43 = sphi 0, %s45
    %s46 = sphi 0, %s43
    %s47 = sphi 0, %s46
    %s63 = sphi 0, %s47
    %s67 = sphi 0, %s67
    %s69 = sphi 0, %s67
    %s70 = sphi 0, %s69
    %s84 = sphi 0, %s70
    %s90 = sphi 0, %s92
    %s93 = sphi 0, %s90
    %s94 = sphi 0, %s93
    %s110 = sphi 0, %s94
    %s116 = sphi 0, %s118
    %s119 = sphi 0, %s116
    %s120 = sphi 0, %s119
    %s136 = sphi 0, %s120
    %s142 = sphi 0, %s144
    %s145 = sphi 0, %s142
    %s146 = sphi 0, %s145
    %s162 = sphi 0, %s146
  $region4: #{conv_bn_relu.2} parent=0 // loop_header_branch
    %15 = sbr.rel (%p13) target = $region8
  $region5: #{conv_bn_relu.2} parent=0 // loop_body
    %s17 = ssub.s32 %s12, 1
    %s18 = ssub.s32 %s12, 2
    %s19 = sadd.s32 %s12, 1
    %s21 = sadd.s32 %s20, 1
    %p24 = scmp.eq.s32.totalorder %s12, 1
    %p25 = scmp.ne.s32.totalorder %s20, %s22
    %p26 = scmp.eq.s32.totalorder %s12, 0
    %p27 = por %p25, %p26
    %p28 = scmp.ne.s32.totalorder %s20, %s22
    %p29 = scmp.eq.s32.totalorder %s17, 1
    %p30 = por %p28, %p29
    %p31 = scmp.ne.s32.totalorder %s22, %s23
    %p32 = scmp.eq.s32.totalorder %s17, 0
    %p33 = por %p31, %p32
    %p34 = scmp.ne.s32.totalorder %s22, %s23
    %p35 = scmp.eq.s32.totalorder %s18, 1
    %p36 = por %p34, %p35
    %p38 = scmp.ne.s32.totalorder %s23, %s37
    %p39 = scmp.eq.s32.totalorder %s18, 0
    %p40 = por %p38, %p39
    %s41 = ssub.s32 %s12, %s19
    %p42 = scmp.eq.s32.totalorder %s41, 0
    %s44 = sadd.s32 %s43, 1
    %s45 = scalar_select %p42, %s43, %s44
    %p48 = pneg %p42
    %p49 = scmp.eq.s32.totalorder %s12, 1
    %p50 = por %p48, %p49
    %p51 = scmp.ne.s32.totalorder %s43, %s46
    %p52 = scmp.eq.s32.totalorder %s12, 0
    %p53 = por %p51, %p52
    %p54 = scmp.ne.s32.totalorder %s43, %s46
    %p55 = scmp.eq.s32.totalorder %s17, 1
    %p56 = por %p54, %p55
    %p57 = scmp.ne.s32.totalorder %s46, %s47
    %p58 = scmp.eq.s32.totalorder %s17, 0
    %p59 = por %p57, %p58
    %p60 = scmp.ne.s32.totalorder %s46, %s47
    %p61 = scmp.eq.s32.totalorder %s18, 1
    %p62 = por %p60, %p61
    %p64 = scmp.ne.s32.totalorder %s47, %s63
    %p65 = scmp.eq.s32.totalorder %s18, 0
    %p66 = por %p64, %p65
    %s68 = sadd.s32 %s67, 1
    %p71 = scmp.eq.s32.totalorder %s12, 1
    %p72 = scmp.ne.s32.totalorder %s67, %s69
    %p73 = scmp.eq.s32.totalorder %s12, 0
    %p74 = por %p72, %p73
    %p75 = scmp.ne.s32.totalorder %s67, %s69
    %p76 = scmp.eq.s32.totalorder %s17, 1
    %p77 = por %p75, %p76
    %p78 = scmp.ne.s32.totalorder %s69, %s70
    %p79 = scmp.eq.s32.totalorder %s17, 0
    %p80 = por %p78, %p79
    %p81 = scmp.ne.s32.totalorder %s69, %s70
    %p82 = scmp.eq.s32.totalorder %s18, 1
    %p83 = por %p81, %p82
    %p85 = scmp.ne.s32.totalorder %s70, %s84
    %p86 = scmp.eq.s32.totalorder %s18, 0
    %p87 = por %p85, %p86
    %s88 = ssub.s32 %s12, %s19
    %p89 = scmp.eq.s32.totalorder %s88, 0
    %s91 = sadd.s32 %s90, 1
    %s92 = scalar_select %p89, %s90, %s91
    %p95 = pneg %p89
    %p96 = scmp.eq.s32.totalorder %s12, 1
    %p97 = por %p95, %p96
    %p98 = scmp.ne.s32.totalorder %s90, %s93
    %p99 = scmp.eq.s32.totalorder %s12, 0
    %p100 = por %p98, %p99
    %p101 = scmp.ne.s32.totalorder %s90, %s93
    %p102 = scmp.eq.s32.totalorder %s17, 1
    %p103 = por %p101, %p102
    %p104 = scmp.ne.s32.totalorder %s93, %s94
    %p105 = scmp.eq.s32.totalorder %s17, 0
    %p106 = por %p104, %p105
    %p107 = scmp.ne.s32.totalorder %s93, %s94
    %p108 = scmp.eq.s32.totalorder %s18, 1
    %p109 = por %p107, %p108
    %p111 = scmp.ne.s32.totalorder %s94, %s110
    %p112 = scmp.eq.s32.totalorder %s18, 0
    %p113 = por %p111, %p112
    %s114 = ssub.s32 %s12, %s19
    %p115 = scmp.eq.s32.totalorder %s114, 0
    %s117 = sadd.s32 %s116, 1
    %s118 = scalar_select %p115, %s116, %s117
    %p121 = pneg %p115
    %p122 = scmp.eq.s32.totalorder %s12, 1
    %p123 = por %p121, %p122
    %p124 = scmp.ne.s32.totalorder %s116, %s119
    %p125 = scmp.eq.s32.totalorder %s12, 0
    %p126 = por %p124, %p125
    %p127 = scmp.ne.s32.totalorder %s116, %s119
    %p128 = scmp.eq.s32.totalorder %s17, 1
    %p129 = por %p127, %p128
    %p130 = scmp.ne.s32.totalorder %s119, %s120
    %p131 = scmp.eq.s32.totalorder %s17, 0
    %p132 = por %p130, %p131
    %p133 = scmp.ne.s32.totalorder %s119, %s120
    %p134 = scmp.eq.s32.totalorder %s18, 1
    %p135 = por %p133, %p134
    %p137 = scmp.ne.s32.totalorder %s120, %s136
    %p138 = scmp.eq.s32.totalorder %s18, 0
    %p139 = por %p137, %p138
    %s140 = ssub.s32 %s12, %s19
    %p141 = scmp.eq.s32.totalorder %s140, 0
    %s143 = sadd.s32 %s142, 1
    %s144 = scalar_select %p141, %s142, %s143
    %p147 = pneg %p141
    %p148 = scmp.eq.s32.totalorder %s12, 1
    %p149 = por %p147, %p148
    %p150 = scmp.ne.s32.totalorder %s142, %s145
    %p151 = scmp.eq.s32.totalorder %s12, 0
    %p152 = por %p150, %p151
    %p153 = scmp.ne.s32.totalorder %s142, %s145
    %p154 = scmp.eq.s32.totalorder %s17, 1
    %p155 = por %p153, %p154
    %p156 = scmp.ne.s32.totalorder %s145, %s146
    %p157 = scmp.eq.s32.totalorder %s17, 0
    %p158 = por %p156, %p157
    %p159 = scmp.ne.s32.totalorder %s145, %s146
    %p160 = scmp.eq.s32.totalorder %s18, 1
    %p161 = por %p159, %p160
    %p163 = scmp.ne.s32.totalorder %s146, %s162
    %p164 = scmp.eq.s32.totalorder %s18, 0
    %p165 = por %p163, %p164
    %p166 = scmp.le.s32.totalorder 1, %s12
    %p167 = scmp.lt.s32.totalorder %s12, 3
    %p168 = pnand %p166, %p167
    %p169 = pneg %p168
    // Predicated region
    $region9: #{conv_bn_relu.2} parent=5 // pred_check
      _
    $region10: #{conv_bn_relu.2} parent=5 // pred_check_branch
      %171 = sbr.rel (%p168) target = $region12
    $region11: #{conv_bn_relu.2} parent=5 // pred_region
      %s172 = ssub.s32 %s12, 1
      // Predicated region
      $region13: #{conv_bn_relu.2} parent=11 // pred_check
        %p173 = pneg %p33
      $region14: #{conv_bn_relu.2} parent=11 // pred_check_branch
        %175 = sbr.rel (%p173) target = $region16
      $region15: #{conv_bn_relu.2} parent=11 // pred_region
        _
      $region16: #{conv_bn_relu.2} parent=11 // pred_fallthru
        _
      // Predicated region
      $region17: #{conv_bn_relu.2} parent=11 // pred_check
        %p176 = pneg %p80
      $region18: #{conv_bn_relu.2} parent=11 // pred_check_branch
        %178 = sbr.rel (%p176) target = $region20
      $region19: #{conv_bn_relu.2} parent=11 // pred_region
        _
      $region20: #{conv_bn_relu.2} parent=11 // pred_fallthru
        _
    $region12: #{conv_bn_relu.2} parent=5 // pred_fallthru
      _
    %p179 = scmp.lt.s32.totalorder %s12, 2
    // Predicated region
    $region21: #{conv_bn_relu.2} parent=5 // pred_check
      %p180 = pneg %p179
    $region22: #{conv_bn_relu.2} parent=5 // pred_check_branch
      %182 = sbr.rel (%p180) target = $region24
    $region23: #{conv_bn_relu.2} parent=5 // pred_region
      // Predicated region
      $region25: #{conv_bn_relu.2} parent=23 // pred_check
        %p183 = pneg %p53
      $region26: #{conv_bn_relu.2} parent=23 // pred_check_branch
        %185 = sbr.rel (%p183) target = $region28
      $region27: #{conv_bn_relu.2} parent=23 // pred_region
        %p186 = scmp.lt.s32.totalorder %s12, 1
        %s187 = scalar_select %p186, %s12, 1
        %s188 = smul.addr %s187, 3
        %s189 = smul.addr %s188, 4
        %s190 = scalar_lea.vmem %s1, %s189
      $region28: #{conv_bn_relu.2} parent=23 // pred_fallthru
        _
    $region24: #{conv_bn_relu.2} parent=5 // pred_fallthru
      _
    %p191 = scmp.le.s32.totalorder 1, %s12
    %p192 = scmp.lt.s32.totalorder %s12, 3
    %p193 = pnand %p191, %p192
    %p194 = pneg %p193
    // Predicated region
    $region29: #{conv_bn_relu.2} parent=5 // pred_check
      _
    $region30: #{conv_bn_relu.2} parent=5 // pred_check_branch
      %196 = sbr.rel (%p193) target = $region32
    $region31: #{conv_bn_relu.2} parent=5 // pred_region
      %s197 = ssub.s32 %s12, 1
      %p198 = pneg %p33
      %p199 = pneg %p30
      %p200 = scmp.lt.s32.totalorder %s17, 1
      %s201 = scalar_select %p200, %s17, 1
      %s202 = smul.addr %s201, 3
      %s203 = smul.addr %s202, 4
      %s204 = scalar_lea.vmem %s1, %s203
      %p205 = pneg %p59
      %p206 = pneg %p56
      %p207 = pneg %p80
      %p208 = pneg %p77
      %p209 = pneg %p106
      %p210 = pneg %p103
      %p211 = scmp.lt.s32.totalorder %s17, 1
      %s212 = scalar_select %p211, %s17, 1
      %s213 = smul.addr %s212, 3
      %s214 = smul.addr %s213, 8
      %s215 = scalar_lea.vmem %s3, %s214
      %p216 = pneg %p132
      %p217 = pneg %p129
      %p218 = scmp.lt.s32.totalorder %s17, 1
      %s219 = scalar_select %p218, %s17, 1
      %s220 = smul.addr %s219, 8
      %s221 = scalar_lea.vmem %s4, %s220
      %p222 = pneg %p158
      %p223 = pneg %p155
      %p224 = scmp.lt.s32.totalorder %s17, 1
      %s225 = scalar_select %p224, %s17, 1
      %s226 = smul.addr %s225, 8
      %s227 = scalar_lea.vmem %s5, %s226
      %p228 = scmp.lt.s32.totalorder %s17, 1
      %s229 = scalar_select %p228, %s17, 1
      %s230 = smul.addr %s229, 3
      %s231 = smul.addr %s230, 4
      %s232 = scalar_lea.vmem %s1, %s231
      %p233 = scmp.lt.s32.totalorder %s17, 1
      %s234 = scalar_select %p233, %s17, 1
      %s235 = smul.addr %s234, 3
      %s236 = smul.addr %s235, 8
      %s237 = scalar_lea.vmem %s3, %s236
      %p238 = scmp.lt.s32.totalorder %s17, 1
      %s239 = scalar_select %p238, %s17, 1
      %s240 = smul.addr %s239, 8
      %s241 = scalar_lea.vmem %s4, %s240
      %p242 = scmp.lt.s32.totalorder %s17, 1
      %s243 = scalar_select %p242, %s17, 1
      %s244 = smul.addr %s243, 8
      %s245 = scalar_lea.vmem %s5, %s244
      %v246 = vld [vmem:[%s232] sm:$0xff]
      %v247 = vld [vmem:[%s232 + $0x8] sm:$0xf]
      %v248 = vld [vmem:[%s0] sm:$0xff]
      %s249 = scalar_lea.vmem %s0, 8
      %v250 = vld [vmem:[%s249] sm:$0xff]
      %v253 = vcombine.high %v246, %v246
      %254 = vrot.lane.b32.xlu0 %v246, 127
      %v255 = vpop.permute.xlu0 %254
      %256 = vrot.lane.b32.xlu0 %v253, 127
      %v257 = vpop.permute.xlu0 %256
      %258 = vrot.lane.b32.xlu0 %v247, 127
      %v259 = vpop.permute.xlu0 %258
      %vm260 = vcmask 1039360
      %v261 = vsel %vm260, %v255, %v257
      %v262 = vsel %vm260, %v257, %v259
      %vm263 = vcmask 31744
      %v265 = vsel %vm263, %v250, 0
      %vm267 = vcmask 1043456
      %v268 = vsel %vm267, %v261, 0
      %v270 = vsel %vm267, %v262, 0
      %v272 = vsel %vm267, %v259, 0
      %274 = vmatprep.subr.mxu0 %v270
      %275 = vmatpush1.msra.mxu0 %v268
      %276 = vmatprep.subr.mxu0 0.0
      %277 = vmatpush1.msra.mxu0 0.0
      %278 = vmatprep.subr.mxu0 0.0
      %279 = vmatpush1.msra.mxu0 0.0
      %280 = vmatprep.subr.mxu0 0.0
      %281 = vmatpush1.msra.mxu0 0.0
      %282 = vmatprep.subr.mxu0 0.0
      %283 = vmatpush1.msra.mxu0 0.0
      %284 = vmatprep.subr.mxu0 0.0
      %285 = vmatpush1.msra.mxu0 0.0
      %286 = vmatprep.subr.mxu0 0.0
      %287 = vmatpush1.msra.mxu0 0.0
      %288 = vmatprep.subr.mxu0 0.0
      %289 = vmatpush1.msra.mxu0 0.0
      %290 = vmatprep.subr.mxu0 0.0
      %291 = vmatpush1.msra.mxu0 0.0
      %292 = vmatprep.subr.mxu0 0.0
      %293 = vmatpush1.msra.mxu0 0.0
      %294 = vmatprep.subr.mxu0 0.0
      %295 = vmatpush1.msra.mxu0 0.0
      %296 = vmatprep.subr.mxu0 0.0
      %297 = vmatpush1.msra.mxu0 0.0
      %298 = vmatprep.subr.mxu0 0.0
      %299 = vmatpush1.msra.mxu0 0.0
      %300 = vmatprep.subr.mxu0 0.0
      %301 = vmatpush1.msra.mxu0 0.0
      %302 = vmatprep.subr.mxu0 0.0
      %303 = vmatpush1.msra.mxu0 0.0
      %304 = vmatprep.subr.mxu0 0.0
      %305 = vmatpush1.msra.mxu0 0.0
      %306 = vmatprep.subr.mxu0 0.0
      %307 = vmatpush1.msra.mxu0 0.0
      %308 = vmatprep.subr.mxu0 0.0
      %309 = vmatpush1.msra.mxu0 0.0
      %310 = vmatprep.subr.mxu0 0.0
      %311 = vmatpush1.msra.mxu0 0.0
      %312 = vmatprep.subr.mxu0 0.0
      %313 = vmatpush1.msra.mxu0 0.0
      %314 = vmatprep.subr.mxu0 0.0
      %315 = vmatpush1.msra.mxu0 0.0
      %316 = vmatprep.subr.mxu0 0.0
      %317 = vmatpush1.msra.mxu0 0.0
      %318 = vmatprep.subr.mxu0 0.0
      %319 = vmatpush1.msra.mxu0 0.0
      %320 = vmatprep.subr.mxu0 0.0
      %321 = vmatpush1.msra.mxu0 0.0
      %322 = vmatprep.subr.mxu0 0.0
      %323 = vmatpush1.msra.mxu0 0.0
      %324 = vmatprep.subr.mxu0 0.0
      %325 = vmatpush1.msra.mxu0 0.0
      %326 = vmatprep.subr.mxu0 0.0
      %327 = vmatpush1.msra.mxu0 0.0
      %328 = vmatprep.subr.mxu0 0.0
      %329 = vmatpush1.msra.mxu0 0.0
      %330 = vmatprep.subr.mxu0 0.0
      %331 = vmatpush1.msra.mxu0 0.0
      %332 = vmatprep.subr.mxu0 0.0
      %333 = vmatpush1.msra.mxu0 0.0
      %334 = vmatprep.subr.mxu0 0.0
      %335 = vmatpush1.msra.mxu0 0.0
      %336 = vmatprep.subr.mxu0 0.0
      %337 = vmatpush1.msra.mxu0 0.0
      %338 = vmatprep.mubr.f32.mxu0 0.0
      %339 = vmatmul.mubr.f32.gmra.mrb[0].mxu0 %v265
      %v340 = vpop.f32.mrb[0].mxu0
      %v341 = vadd.f32 0.0, %v340
      %v342 = vpop.f32.mrb[0].mxu0
      %v343 = vadd.f32 0.0, %v342
      %344 = vdwg.mxu0
      %345 = vmatprep.subr.mxu0 0.0
      %346 = vmatpush1.msra.mxu0 %v272
      %347 = vmatprep.subr.mxu0 0.0
      %348 = vmatpush1.msra.mxu0 0.0
      %349 = vmatprep.subr.mxu0 0.0
      %350 = vmatpush1.msra.mxu0 0.0
      %351 = vmatprep.subr.mxu0 0.0
      %352 = vmatpush1.msra.mxu0 0.0
      %353 = vmatprep.subr.mxu0 0.0
      %354 = vmatpush1.msra.mxu0 0.0
      %355 = vmatprep.subr.mxu0 0.0
      %356 = vmatpush1.msra.mxu0 0.0
      %357 = vmatprep.subr.mxu0 0.0
      %358 = vmatpush1.msra.mxu0 0.0
      %359 = vmatprep.subr.mxu0 0.0
      %360 = vmatpush1.msra.mxu0 0.0
      %361 = vmatprep.subr.mxu0 0.0
      %362 = vmatpush1.msra.mxu0 0.0
      %363 = vmatprep.subr.mxu0 0.0
      %364 = vmatpush1.msra.mxu0 0.0
      %365 = vmatprep.subr.mxu0 0.0
      %366 = vmatpush1.msra.mxu0 0.0
      %367 = vmatprep.subr.mxu0 0.0
      %368 = vmatpush1.msra.mxu0 0.0
      %369 = vmatprep.subr.mxu0 0.0
      %370 = vmatpush1.msra.mxu0 0.0
      %371 = vmatprep.subr.mxu0 0.0
      %372 = vmatpush1.msra.mxu0 0.0
      %373 = vmatprep.subr.mxu0 0.0
      %374 = vmatpush1.msra.mxu0 0.0
      %375 = vmatprep.subr.mxu0 0.0
      %376 = vmatpush1.msra.mxu0 0.0
      %377 = vmatprep.subr.mxu0 0.0
      %378 = vmatpush1.msra.mxu0 0.0
      %379 = vmatprep.subr.mxu0 0.0
      %380 = vmatpush1.msra.mxu0 0.0
      %381 = vmatprep.subr.mxu0 0.0
      %382 = vmatpush1.msra.mxu0 0.0
      %383 = vmatprep.subr.mxu0 0.0
      %384 = vmatpush1.msra.mxu0 0.0
      %385 = vmatprep.subr.mxu0 0.0
      %386 = vmatpush1.msra.mxu0 0.0
      %387 = vmatprep.subr.mxu0 0.0
      %388 = vmatpush1.msra.mxu0 0.0
      %389 = vmatprep.subr.mxu0 0.0
      %390 = vmatpush1.msra.mxu0 0.0
      %391 = vmatprep.subr.mxu0 0.0
      %392 = vmatpush1.msra.mxu0 0.0
      %393 = vmatprep.subr.mxu0 0.0
      %394 = vmatpush1.msra.mxu0 0.0
      %395 = vmatprep.subr.mxu0 0.0
      %396 = vmatpush1.msra.mxu0 0.0
      %397 = vmatprep.subr.mxu0 0.0
      %398 = vmatpush1.msra.mxu0 0.0
      %399 = vmatprep.subr.mxu0 0.0
      %400 = vmatpush1.msra.mxu0 0.0
      %401 = vmatprep.subr.mxu0 0.0
      %402 = vmatpush1.msra.mxu0 0.0
      %403 = vmatprep.subr.mxu0 0.0
      %404 = vmatpush1.msra.mxu0 0.0
      %405 = vmatprep.subr.mxu0 0.0
      %406 = vmatpush1.msra.mxu0 0.0
      %407 = vmatprep.subr.mxu0 0.0
      %408 = vmatpush1.msra.mxu0 0.0
      %409 = vmatprep.mubr.f32.mxu0 0.0
      %410 = vmatmul.mubr.f32.gmra.mrb[0].mxu0 %v265
      %v411 = vpop.f32.mrb[0].mxu0
      %v412 = vadd.f32 0.0, %v411
      %v413 = vpop.f32.mrb[0].mxu0
      %414 = vdwg.mxu0
      %v416 = vsel %vm263, %v248, 0
      %v418 = vsel %vm267, %v246, 0
      %v420 = vsel %vm267, %v253, 0
      %v422 = vsel %vm267, %v247, 0
      %424 = vmatprep.subr.mxu0 %v420
      %425 = vmatpush1.msra.mxu0 %v418
      %426 = vmatprep.subr.mxu0 0.0
      %427 = vmatpush1.msra.mxu0 0.0
      %428 = vmatprep.subr.mxu0 0.0
      %429 = vmatpush1.msra.mxu0 0.0
      %430 = vmatprep.subr.mxu0 0.0
      %431 = vmatpush1.msra.mxu0 0.0
      %432 = vmatprep.subr.mxu0 0.0
      %433 = vmatpush1.msra.mxu0 0.0
      %434 = vmatprep.subr.mxu0 0.0
      %435 = vmatpush1.msra.mxu0 0.0
      %436 = vmatprep.subr.mxu0 0.0
      %437 = vmatpush1.msra.mxu0 0.0
      %438 = vmatprep.subr.mxu0 0.0
      %439 = vmatpush1.msra.mxu0 0.0
      %440 = vmatprep.subr.mxu0 0.0
      %441 = vmatpush1.msra.mxu0 0.0
      %442 = vmatprep.subr.mxu0 0.0
      %443 = vmatpush1.msra.mxu0 0.0
      %444 = vmatprep.subr.mxu0 0.0
      %445 = vmatpush1.msra.mxu0 0.0
      %446 = vmatprep.subr.mxu0 0.0
      %447 = vmatpush1.msra.mxu0 0.0
      %448 = vmatprep.subr.mxu0 0.0
      %449 = vmatpush1.msra.mxu0 0.0
      %450 = vmatprep.subr.mxu0 0.0
      %451 = vmatpush1.msra.mxu0 0.0
      %452 = vmatprep.subr.mxu0 0.0
      %453 = vmatpush1.msra.mxu0 0.0
      %454 = vmatprep.subr.mxu0 0.0
      %455 = vmatpush1.msra.mxu0 0.0
      %456 = vmatprep.subr.mxu0 0.0
      %457 = vmatpush1.msra.mxu0 0.0
      %458 = vmatprep.subr.mxu0 0.0
      %459 = vmatpush1.msra.mxu0 0.0
      %460 = vmatprep.subr.mxu0 0.0
      %461 = vmatpush1.msra.mxu0 0.0
      %462 = vmatprep.subr.mxu0 0.0
      %463 = vmatpush1.msra.mxu0 0.0
      %464 = vmatprep.subr.mxu0 0.0
      %465 = vmatpush1.msra.mxu0 0.0
      %466 = vmatprep.subr.mxu0 0.0
      %467 = vmatpush1.msra.mxu0 0.0
      %468 = vmatprep.subr.mxu0 0.0
      %469 = vmatpush1.msra.mxu0 0.0
      %470 = vmatprep.subr.mxu0 0.0
      %471 = vmatpush1.msra.mxu0 0.0
      %472 = vmatprep.subr.mxu0 0.0
      %473 = vmatpush1.msra.mxu0 0.0
      %474 = vmatprep.subr.mxu0 0.0
      %475 = vmatpush1.msra.mxu0 0.0
      %476 = vmatprep.subr.mxu0 0.0
      %477 = vmatpush1.msra.mxu0 0.0
      %478 = vmatprep.subr.mxu0 0.0
      %479 = vmatpush1.msra.mxu0 0.0
      %480 = vmatprep.subr.mxu0 0.0
      %481 = vmatpush1.msra.mxu0 0.0
      %482 = vmatprep.subr.mxu0 0.0
      %483 = vmatpush1.msra.mxu0 0.0
      %484 = vmatprep.subr.mxu0 0.0
      %485 = vmatpush1.msra.mxu0 0.0
      %486 = vmatprep.subr.mxu0 0.0
      %487 = vmatpush1.msra.mxu0 0.0
      %488 = vmatprep.mubr.f32.mxu0 0.0
      %489 = vmatmul.mubr.f32.gmra.mrb[0].mxu0 %v416
      %v490 = vpop.f32.mrb[0].mxu0
      %v491 = vadd.f32 %v341, %v490
      %v492 = vpop.f32.mrb[0].mxu0
      %v493 = vadd.f32 %v343, %v492
      %494 = vdwg.mxu0
      %495 = vmatprep.subr.mxu0 0.0
      %496 = vmatpush1.msra.mxu0 %v422
      %497 = vmatprep.subr.mxu0 0.0
      %498 = vmatpush1.msra.mxu0 0.0
      %499 = vmatprep.subr.mxu0 0.0
      %500 = vmatpush1.msra.mxu0 0.0
      %501 = vmatprep.subr.mxu0 0.0
      %502 = vmatpush1.msra.mxu0 0.0
      %503 = vmatprep.subr.mxu0 0.0
      %504 = vmatpush1.msra.mxu0 0.0
      %505 = vmatprep.subr.mxu0 0.0
      %506 = vmatpush1.msra.mxu0 0.0
      %507 = vmatprep.subr.mxu0 0.0
      %508 = vmatpush1.msra.mxu0 0.0
      %509 = vmatprep.subr.mxu0 0.0
      %510 = vmatpush1.msra.mxu0 0.0
      %511 = vmatprep.subr.mxu0 0.0
      %512 = vmatpush1.msra.mxu0 0.0
      %513 = vmatprep.subr.mxu0 0.0
      %514 = vmatpush1.msra.mxu0 0.0
      %515 = vmatprep.subr.mxu0 0.0
      %516 = vmatpush1.msra.mxu0 0.0
      %517 = vmatprep.subr.mxu0 0.0
      %518 = vmatpush1.msra.mxu0 0.0
      %519 = vmatprep.subr.mxu0 0.0
      %520 = vmatpush1.msra.mxu0 0.0
      %521 = vmatprep.subr.mxu0 0.0
      %522 = vmatpush1.msra.mxu0 0.0
      %523 = vmatprep.subr.mxu0 0.0
      %524 = vmatpush1.msra.mxu0 0.0
      %525 = vmatprep.subr.mxu0 0.0
      %526 = vmatpush1.msra.mxu0 0.0
      %527 = vmatprep.subr.mxu0 0.0
      %528 = vmatpush1.msra.mxu0 0.0
      %529 = vmatprep.subr.mxu0 0.0
      %530 = vmatpush1.msra.mxu0 0.0
      %531 = vmatprep.subr.mxu0 0.0
      %532 = vmatpush1.msra.mxu0 0.0
      %533 = vmatprep.subr.mxu0 0.0
      %534 = vmatpush1.msra.mxu0 0.0
      %535 = vmatprep.subr.mxu0 0.0
      %536 = vmatpush1.msra.mxu0 0.0
      %537 = vmatprep.subr.mxu0 0.0
      %538 = vmatpush1.msra.mxu0 0.0
      %539 = vmatprep.subr.mxu0 0.0
      %540 = vmatpush1.msra.mxu0 0.0
      %541 = vmatprep.subr.mxu0 0.0
      %542 = vmatpush1.msra.mxu0 0.0
      %543 = vmatprep.subr.mxu0 0.0
      %544 = vmatpush1.msra.mxu0 0.0
      %545 = vmatprep.subr.mxu0 0.0
      %546 = vmatpush1.msra.mxu0 0.0
      %547 = vmatprep.subr.mxu0 0.0
      %548 = vmatpush1.msra.mxu0 0.0
      %549 = vmatprep.subr.mxu0 0.0
      %550 = vmatpush1.msra.mxu0 0.0
      %551 = vmatprep.subr.mxu0 0.0
      %552 = vmatpush1.msra.mxu0 0.0
      %553 = vmatprep.subr.mxu0 0.0
      %554 = vmatpush1.msra.mxu0 0.0
      %555 = vmatprep.subr.mxu0 0.0
      %556 = vmatpush1.msra.mxu0 0.0
      %557 = vmatprep.subr.mxu0 0.0
      %558 = vmatpush1.msra.mxu0 0.0
      %559 = vmatprep.mubr.f32.mxu0 0.0
      %560 = vmatmul.mubr.f32.gmra.mrb[0].mxu0 %v416
      %v561 = vpop.f32.mrb[0].mxu0
      %v562 = vadd.f32 %v412, %v561
      %v563 = vpop.f32.mrb[0].mxu0
      %564 = vdwg.mxu0
      %v565 = vld [vmem:[%s232] sm:$0xff]
      %v566 = vld [vmem:[%s232 + $0x8] sm:$0xf]
      %s567 = scalar_lea.vmem %s0, 16
      %v568 = vld [vmem:[%s567] sm:$0xff]
      %v571 = vcombine.high %v565, %v565
      %572 = vrot.lane.b32.xlu0 %v565, 126
      %v573 = vpop.permute.xlu0 %572
      %574 = vrot.lane.b32.xlu0 %v571, 126
      %v575 = vpop.permute.xlu0 %574
      %576 = vrot.lane.b32.xlu0 %v566, 126
      %v577 = vpop.permute.xlu0 %576
      %vm578 = vcmask 1031168
      %v579 = vsel %vm578, %v573, %v575
      %v580 = vsel %vm578, %v575, %v577
      %v582 = vsel %vm263, %v568, 0
      %v584 = vsel %vm267, %v579, 0
      %v586 = vsel %vm267, %v580, 0
      %v588 = vsel %vm267, %v577, 0
      %590 = vmatprep.subr.mxu0 %v586
      %591 = vmatpush1.msra.mxu0 %v584
      %592 = vmatprep.subr.mxu0 0.0
      %593 = vmatpush1.msra.mxu0 0.0
      %594 = vmatprep.subr.mxu0 0.0
      %595 = vmatpush1.msra.mxu0 0.0
      %596 = vmatprep.subr.mxu0 0.0
      %597 = vmatpush1.msra.mxu0 0.0
      %598 = vmatprep.subr.mxu0 0.0
      %599 = vmatpush1.msra.mxu0 0.0
      %600 = vmatprep.subr.mxu0 0.0
      %601 = vmatpush1.msra.mxu0 0.0
      %602 = vmatprep.subr.mxu0 0.0
      %603 = vmatpush1.msra.mxu0 0.0
      %604 = vmatprep.subr.mxu0 0.0
      %605 = vmatpush1.msra.mxu0 0.0
      %606 = vmatprep.subr.mxu0 0.0
      %607 = vmatpush1.msra.mxu0 0.0
      %608 = vmatprep.subr.mxu0 0.0
      %609 = vmatpush1.msra.mxu0 0.0
      %610 = vmatprep.subr.mxu0 0.0
      %611 = vmatpush1.msra.mxu0 0.0
      %612 = vmatprep.subr.mxu0 0.0
      %613 = vmatpush1.msra.mxu0 0.0
      %614 = vmatprep.subr.mxu0 0.0
      %615 = vmatpush1.msra.mxu0 0.0
      %616 = vmatprep.subr.mxu0 0.0
      %617 = vmatpush1.msra.mxu0 0.0
      %618 = vmatprep.subr.mxu0 0.0
      %619 = vmatpush1.msra.mxu0 0.0
      %620 = vmatprep.subr.mxu0 0.0
      %621 = vmatpush1.msra.mxu0 0.0
      %622 = vmatprep.subr.mxu0 0.0
      %623 = vmatpush1.msra.mxu0 0.0
      %624 = vmatprep.subr.mxu0 0.0
      %625 = vmatpush1.msra.mxu0 0.0
      %626 = vmatprep.subr.mxu0 0.0
      %627 = vmatpush1.msra.mxu0 0.0
      %628 = vmatprep.subr.mxu0 0.0
      %629 = vmatpush1.msra.mxu0 0.0
      %630 = vmatprep.subr.mxu0 0.0
      %631 = vmatpush1.msra.mxu0 0.0
      %632 = vmatprep.subr.mxu0 0.0
      %633 = vmatpush1.msra.mxu0 0.0
      %634 = vmatprep.subr.mxu0 0.0
      %635 = vmatpush1.msra.mxu0 0.0
      %636 = vmatprep.subr.mxu0 0.0
      %637 = vmatpush1.msra.mxu0 0.0
      %638 = vmatprep.subr.mxu0 0.0
      %639 = vmatpush1.msra.mxu0 0.0
      %640 = vmatprep.subr.mxu0 0.0
      %641 = vmatpush1.msra.mxu0 0.0
      %642 = vmatprep.subr.mxu0 0.0
      %643 = vmatpush1.msra.mxu0 0.0
      %644 = vmatprep.subr.mxu0 0.0
      %645 = vmatpush1.msra.mxu0 0.0
      %646 = vmatprep.subr.mxu0 0.0
      %647 = vmatpush1.msra.mxu0 0.0
      %648 = vmatprep.subr.mxu0 0.0
      %649 = vmatpush1.msra.mxu0 0.0
      %650 = vmatprep.subr.mxu0 0.0
      %651 = vmatpush1.msra.mxu0 0.0
      %652 = vmatprep.subr.mxu0 0.0
      %653 = vmatpush1.msra.mxu0 0.0
      %654 = vmatprep.mubr.f32.mxu0 0.0
      %655 = vmatmul.mubr.f32.gmra.mrb[0].mxu0 %v582
      %v656 = vpop.f32.mrb[0].mxu0
      %v657 = vadd.f32 0.0, %v656
      %v658 = vpop.f32.mrb[0].mxu0
      %v659 = vadd.f32 0.0, %v658
      %660 = vdwg.mxu0
      %661 = vmatprep.subr.mxu0 0.0
      %662 = vmatpush1.msra.mxu0 %v588
      %663 = vmatprep.subr.mxu0 0.0
      %664 = vmatpush1.msra.mxu0 0.0
      %665 = vmatprep.subr.mxu0 0.0
      %666 = vmatpush1.msra.mxu0 0.0
      %667 = vmatprep.subr.mxu0 0.0
      %668 = vmatpush1.msra.mxu0 0.0
      %669 = vmatprep.subr.mxu0 0.0
      %670 = vmatpush1.msra.mxu0 0.0
      %671 = vmatprep.subr.mxu0 0.0
      %672 = vmatpush1.msra.mxu0 0.0
      %673 = vmatprep.subr.mxu0 0.0
      %674 = vmatpush1.msra.mxu0 0.0
      %675 = vmatprep.subr.mxu0 0.0
      %676 = vmatpush1.msra.mxu0 0.0
      %677 = vmatprep.subr.mxu0 0.0
      %678 = vmatpush1.msra.mxu0 0.0
      %679 = vmatprep.subr.mxu0 0.0
      %680 = vmatpush1.msra.mxu0 0.0
      %681 = vmatprep.subr.mxu0 0.0
      %682 = vmatpush1.msra.mxu0 0.0
      %683 = vmatprep.subr.mxu0 0.0
      %684 = vmatpush1.msra.mxu0 0.0
      %685 = vmatprep.subr.mxu0 0.0
      %686 = vmatpush1.msra.mxu0 0.0
      %687 = vmatprep.subr.mxu0 0.0
      %688 = vmatpush1.msra.mxu0 0.0
      %689 = vmatprep.subr.mxu0 0.0
      %690 = vmatpush1.msra.mxu0 0.0
      %691 = vmatprep.subr.mxu0 0.0
      %692 = vmatpush1.msra.mxu0 0.0
      %693 = vmatprep.subr.mxu0 0.0
      %694 = vmatpush1.msra.mxu0 0.0
      %695 = vmatprep.subr.mxu0 0.0
      %696 = vmatpush1.msra.mxu0 0.0
      %697 = vmatprep.subr.mxu0 0.0
      %698 = vmatpush1.msra.mxu0 0.0
      %699 = vmatprep.subr.mxu0 0.0
      %700 = vmatpush1.msra.mxu0 0.0
      %701 = vmatprep.subr.mxu0 0.0
      %702 = vmatpush1.msra.mxu0 0.0
      %703 = vmatprep.subr.mxu0 0.0
      %704 = vmatpush1.msra.mxu0 0.0
      %705 = vmatprep.subr.mxu0 0.0
      %706 = vmatpush1.msra.mxu0 0.0
      %707 = vmatprep.subr.mxu0 0.0
      %708 = vmatpush1.msra.mxu0 0.0
      %709 = vmatprep.subr.mxu0 0.0
      %710 = vmatpush1.msra.mxu0 0.0
      %711 = vmatprep.subr.mxu0 0.0
      %712 = vmatpush1.msra.mxu0 0.0
      %713 = vmatprep.subr.mxu0 0.0
      %714 = vmatpush1.msra.mxu0 0.0
      %715 = vmatprep.subr.mxu0 0.0
      %716 = vmatpush1.msra.mxu0 0.0
      %717 = vmatprep.subr.mxu0 0.0
      %718 = vmatpush1.msra.mxu0 0.0
      %719 = vmatprep.subr.mxu0 0.0
      %720 = vmatpush1.msra.mxu0 0.0
      %721 = vmatprep.subr.mxu0 0.0
      %722 = vmatpush1.msra.mxu0 0.0
      %723 = vmatprep.subr.mxu0 0.0
      %724 = vmatpush1.msra.mxu0 0.0
      %725 = vmatprep.mubr.f32.mxu0 0.0
      %726 = vmatmul.mubr.f32.gmra.mrb[0].mxu0 %v582
      %v727 = vpop.f32.mrb[0].mxu0
      %v728 = vadd.f32 0.0, %v727
      %v729 = vpop.f32.mrb[0].mxu0
      %730 = vdwg.mxu0
      %v731 = vadd.f32 %v491, %v657
      %v732 = vadd.f32 %v493, %v659
      %v733 = vadd.f32 %v562, %v728
      %v734 = vld [vmem:[%s232] sm:$0xff]
      %v735 = vld [vmem:[%s232 + $0x8] sm:$0xf]
      %s736 = scalar_lea.vmem %s0, 24
      %v737 = vld [vmem:[%s736] sm:$0xff]
      %v740 = vcombine.high %v734, %v734
      %741 = vrot.lane.b32.xlu0 %v734, 110
      %v742 = vpop.permute.xlu0 %741
      %743 = vrot.lane.b32.xlu0 %v740, 110
      %v744 = vpop.permute.xlu0 %743
      %745 = vrot.lane.b32.xlu0 %v735, 110
      %v746 = vpop.permute.xlu0 %745
      %vm747 = vcmask 900096
      %v748 = vsel %vm747, %v742, %v744
      %v749 = vsel %vm747, %v744, %v746
      %v751 = vsel %vm263, %v737, 0
      %v753 = vsel %vm267, %v748, 0
      %v755 = vsel %vm267, %v749, 0
      %v757 = vsel %vm267, %v746, 0
      %759 = vmatprep.subr.mxu0 %v755
      %760 = vmatpush1.msra.mxu0 %v753
      %761 = vmatprep.subr.mxu0 0.0
      %762 = vmatpush1.msra.mxu0 0.0
      %763 = vmatprep.subr.mxu0 0.0
      %764 = vmatpush1.msra.mxu0 0.0
      %765 = vmatprep.subr.mxu0 0.0
      %766 = vmatpush1.msra.mxu0 0.0
      %767 = vmatprep.subr.mxu0 0.0
      %768 = vmatpush1.msra.mxu0 0.0
      %769 = vmatprep.subr.mxu0 0.0
      %770 = vmatpush1.msra.mxu0 0.0
      %771 = vmatprep.subr.mxu0 0.0
      %772 = vmatpush1.msra.mxu0 0.0
      %773 = vmatprep.subr.mxu0 0.0
      %774 = vmatpush1.msra.mxu0 0.0
      %775 = vmatprep.subr.mxu0 0.0
      %776 = vmatpush1.msra.mxu0 0.0
      %777 = vmatprep.subr.mxu0 0.0
      %778 = vmatpush1.msra.mxu0 0.0
      %779 = vmatprep.subr.mxu0 0.0
      %780 = vmatpush1.msra.mxu0 0.0
      %781 = vmatprep.subr.mxu0 0.0
      %782 = vmatpush1.msra.mxu0 0.0
      %783 = vmatprep.subr.mxu0 0.0
      %784 = vmatpush1.msra.mxu0 0.0
      %785 = vmatprep.subr.mxu0 0.0
      %786 = vmatpush1.msra.mxu0 0.0
      %787 = vmatprep.subr.mxu0 0.0
      %788 = vmatpush1.msra.mxu0 0.0
      %789 = vmatprep.subr.mxu0 0.0
      %790 = vmatpush1.msra.mxu0 0.0
      %791 = vmatprep.subr.mxu0 0.0
      %792 = vmatpush1.msra.mxu0 0.0
      %793 = vmatprep.subr.mxu0 0.0
      %794 = vmatpush1.msra.mxu0 0.0
      %795 = vmatprep.subr.mxu0 0.0
      %796 = vmatpush1.msra.mxu0 0.0
      %797 = vmatprep.subr.mxu0 0.0
      %798 = vmatpush1.msra.mxu0 0.0
      %799 = vmatprep.subr.mxu0 0.0
      %800 = vmatpush1.msra.mxu0 0.0
      %801 = vmatprep.subr.mxu0 0.0
      %802 = vmatpush1.msra.mxu0 0.0
      %803 = vmatprep.subr.mxu0 0.0
      %804 = vmatpush1.msra.mxu0 0.0
      %805 = vmatprep.subr.mxu0 0.0
      %806 = vmatpush1.msra.mxu0 0.0
      %807 = vmatprep.subr.mxu0 0.0
      %808 = vmatpush1.msra.mxu0 0.0
      %809 = vmatprep.subr.mxu0 0.0
      %810 = vmatpush1.msra.mxu0 0.0
      %811 = vmatprep.subr.mxu0 0.0
      %812 = vmatpush1.msra.mxu0 0.0
      %813 = vmatprep.subr.mxu0 0.0
      %814 = vmatpush1.msra.mxu0 0.0
      %815 = vmatprep.subr.mxu0 0.0
      %816 = vmatpush1.msra.mxu0 0.0
      %817 = vmatprep.subr.mxu0 0.0
      %818 = vmatpush1.msra.mxu0 0.0
      %819 = vmatprep.subr.mxu0 0.0
      %820 = vmatpush1.msra.mxu0 0.0
      %821 = vmatprep.subr.mxu0 0.0
      %822 = vmatpush1.msra.mxu0 0.0
      %823 = vmatprep.mubr.f32.mxu0 0.0
      %824 = vmatmul.mubr.f32.gmra.mrb[0].mxu0 %v751
      %v825 = vpop.f32.mrb[0].mxu0
      %v826 = vadd.f32 0.0, %v825
      %v827 = vpop.f32.mrb[0].mxu0
      %v828 = vadd.f32 0.0, %v827
      %829 = vdwg.mxu0
      %830 = vmatprep.subr.mxu0 0.0
      %831 = vmatpush1.msra.mxu0 %v757
      %832 = vmatprep.subr.mxu0 0.0
      %833 = vmatpush1.msra.mxu0 0.0
      %834 = vmatprep.subr.mxu0 0.0
      %835 = vmatpush1.msra.mxu0 0.0
      %836 = vmatprep.subr.mxu0 0.0
      %837 = vmatpush1.msra.mxu0 0.0
      %838 = vmatprep.subr.mxu0 0.0
      %839 = vmatpush1.msra.mxu0 0.0
      %840 = vmatprep.subr.mxu0 0.0
      %841 = vmatpush1.msra.mxu0 0.0
      %842 = vmatprep.subr.mxu0 0.0
      %843 = vmatpush1.msra.mxu0 0.0
      %844 = vmatprep.subr.mxu0 0.0
      %845 = vmatpush1.msra.mxu0 0.0
      %846 = vmatprep.subr.mxu0 0.0
      %847 = vmatpush1.msra.mxu0 0.0
      %848 = vmatprep.subr.mxu0 0.0
      %849 = vmatpush1.msra.mxu0 0.0
      %850 = vmatprep.subr.mxu0 0.0
      %851 = vmatpush1.msra.mxu0 0.0
      %852 = vmatprep.subr.mxu0 0.0
      %853 = vmatpush1.msra.mxu0 0.0
      %854 = vmatprep.subr.mxu0 0.0
      %855 = vmatpush1.msra.mxu0 0.0
      %856 = vmatprep.subr.mxu0 0.0
      %857 = vmatpush1.msra.mxu0 0.0
      %858 = vmatprep.subr.mxu0 0.0
      %859 = vmatpush1.msra.mxu0 0.0
      %860 = vmatprep.subr.mxu0 0.0
      %861 = vmatpush1.msra.mxu0 0.0
      %862 = vmatprep.subr.mxu0 0.0
      %863 = vmatpush1.msra.mxu0 0.0
      %864 = vmatprep.subr.mxu0 0.0
      %865 = vmatpush1.msra.mxu0 0.0
      %866 = vmatprep.subr.mxu0 0.0
      %867 = vmatpush1.msra.mxu0 0.0
      %868 = vmatprep.subr.mxu0 0.0
      %869 = vmatpush1.msra.mxu0 0.0
      %870 = vmatprep.subr.mxu0 0.0
      %871 = vmatpush1.msra.mxu0 0.0
      %872 = vmatprep.subr.mxu0 0.0
      %873 = vmatpush1.msra.mxu0 0.0
      %874 = vmatprep.subr.mxu0 0.0
      %875 = vmatpush1.msra.mxu0 0.0
      %876 = vmatprep.subr.mxu0 0.0
      %877 = vmatpush1.msra.mxu0 0.0
      %878 = vmatprep.subr.mxu0 0.0
      %879 = vmatpush1.msra.mxu0 0.0
      %880 = vmatprep.subr.mxu0 0.0
      %881 = vmatpush1.msra.mxu0 0.0
      %882 = vmatprep.subr.mxu0 0.0
      %883 = vmatpush1.msra.mxu0 0.0
      %884 = vmatprep.subr.mxu0 0.0
      %885 = vmatpush1.msra.mxu0 0.0
      %886 = vmatprep.subr.mxu0 0.0
      %887 = vmatpush1.msra.mxu0 0.0
      %888 = vmatprep.subr.mxu0 0.0
      %889 = vmatpush1.msra.mxu0 0.0
      %890 = vmatprep.subr.mxu0 0.0
      %891 = vmatpush1.msra.mxu0 0.0
      %892 = vmatprep.subr.mxu0 0.0
      %893 = vmatpush1.msra.mxu0 0.0
      %894 = vmatprep.mubr.f32.mxu0 0.0
      %895 = vmatmul.mubr.f32.gmra.mrb[0].mxu0 %v751
      %v896 = vpop.f32.mrb[0].mxu0
      %v897 = vadd.f32 0.0, %v896
      %v898 = vpop.f32.mrb[0].mxu0
      %899 = vdwg.mxu0
      %v900 = vadd.f32 %v731, %v826
      %v901 = vadd.f32 %v732, %v828
      %v902 = vadd.f32 %v733, %v897
      %v903 = vld [vmem:[%s232] sm:$0xff]
      %v904 = vld [vmem:[%s232 + $0x8] sm:$0xf]
      %s905 = scalar_lea.vmem %s0, 32
      %v906 = vld [vmem:[%s905] sm:$0xff]
      %v909 = vcombine.high %v903, %v903
      %910 = vrot.lane.b32.xlu0 %v903, 109
      %v911 = vpop.permute.xlu0 %910
      %912 = vrot.lane.b32.xlu0 %v909, 109
      %v913 = vpop.permute.xlu0 %912
      %914 = vrot.lane.b32.xlu0 %v904, 109
      %v915 = vpop.permute.xlu0 %914
      %vm916 = vcmask 891904
      %v917 = vsel %vm916, %v911, %v913
      %v918 = vsel %vm916, %v913, %v915
      %v920 = vsel %vm263, %v906, 0
      %v922 = vsel %vm267, %v917, 0
      %v924 = vsel %vm267, %v918, 0
      %v926 = vsel %vm267, %v915, 0
      %928 = vmatprep.subr.mxu0 %v924
      %929 = vmatpush1.msra.mxu0 %v922
      %930 = vmatprep.subr.mxu0 0.0
      %931 = vmatpush1.msra.mxu0 0.0
      %932 = vmatprep.subr.mxu0 0.0
      %933 = vmatpush1.msra.mxu0 0.0
      %934 = vmatprep.subr.mxu0 0.0
      %935 = vmatpush1.msra.mxu0 0.0
      %936 = vmatprep.subr.mxu0 0.0
      %937 = vmatpush1.msra.mxu0 0.0
      %938 = vmatprep.subr.mxu0 0.0
      %939 = vmatpush1.msra.mxu0 0.0
      %940 = vmatprep.subr.mxu0 0.0
      %941 = vmatpush1.msra.mxu0 0.0
      %942 = vmatprep.subr.mxu0 0.0
      %943 = vmatpush1.msra.mxu0 0.0
      %944 = vmatprep.subr.mxu0 0.0
      %945 = vmatpush1.msra.mxu0 0.0
      %946 = vmatprep.subr.mxu0 0.0
      %947 = vmatpush1.msra.mxu0 0.0
      %948 = vmatprep.subr.mxu0 0.0
      %949 = vmatpush1.msra.mxu0 0.0
      %950 = vmatprep.subr.mxu0 0.0
      %951 = vmatpush1.msra.mxu0 0.0
      %952 = vmatprep.subr.mxu0 0.0
      %953 = vmatpush1.msra.mxu0 0.0
      %954 = vmatprep.subr.mxu0 0.0
      %955 = vmatpush1.msra.mxu0 0.0
      %956 = vmatprep.subr.mxu0 0.0
      %957 = vmatpush1.msra.mxu0 0.0
      %958 = vmatprep.subr.mxu0 0.0
      %959 = vmatpush1.msra.mxu0 0.0
      %960 = vmatprep.subr.mxu0 0.0
      %961 = vmatpush1.msra.mxu0 0.0
      %962 = vmatprep.subr.mxu0 0.0
      %963 = vmatpush1.msra.mxu0 0.0
      %964 = vmatprep.subr.mxu0 0.0
      %965 = vmatpush1.msra.mxu0 0.0
      %966 = vmatprep.subr.mxu0 0.0
      %967 = vmatpush1.msra.mxu0 0.0
      %968 = vmatprep.subr.mxu0 0.0
      %969 = vmatpush1.msra.mxu0 0.0
      %970 = vmatprep.subr.mxu0 0.0
      %971 = vmatpush1.msra.mxu0 0.0
      %972 = vmatprep.subr.mxu0 0.0
      %973 = vmatpush1.msra.mxu0 0.0
      %974 = vmatprep.subr.mxu0 0.0
      %975 = vmatpush1.msra.mxu0 0.0
      %976 = vmatprep.subr.mxu0 0.0
      %977 = vmatpush1.msra.mxu0 0.0
      %978 = vmatprep.subr.mxu0 0.0
      %979 = vmatpush1.msra.mxu0 0.0
      %980 = vmatprep.subr.mxu0 0.0
      %981 = vmatpush1.msra.mxu0 0.0
      %982 = vmatprep.subr.mxu0 0.0
      %983 = vmatpush1.msra.mxu0 0.0
      %984 = vmatprep.subr.mxu0 0.0
      %985 = vmatpush1.msra.mxu0 0.0
      %986 = vmatprep.subr.mxu0 0.0
      %987 = vmatpush1.msra.mxu0 0.0
      %988 = vmatprep.subr.mxu0 0.0
      %989 = vmatpush1.msra.mxu0 0.0
      %990 = vmatprep.subr.mxu0 0.0
      %991 = vmatpush1.msra.mxu0 0.0
      %992 = vmatprep.mubr.f32.mxu0 0.0
      %993 = vmatmul.mubr.f32.gmra.mrb[0].mxu0 %v920
      %v994 = vpop.f32.mrb[0].mxu0
      %v995 = vadd.f32 0.0, %v994
      %v996 = vpop.f32.mrb[0].mxu0
      %v997 = vadd.f32 0.0, %v996
      %998 = vdwg.mxu0
      %999 = vmatprep.subr.mxu0 0.0
      %1000 = vmatpush1.msra.mxu0 %v926
      %1001 = vmatprep.subr.mxu0 0.0
      %1002 = vmatpush1.msra.mxu0 0.0
      %1003 = vmatprep.subr.mxu0 0.0
      %1004 = vmatpush1.msra.mxu0 0.0
      %1005 = vmatprep.subr.mxu0 0.0
      %1006 = vmatpush1.msra.mxu0 0.0
      %1007 = vmatprep.subr.mxu0 0.0
      %1008 = vmatpush1.msra.mxu0 0.0
      %1009 = vmatprep.subr.mxu0 0.0
      %1010 = vmatpush1.msra.mxu0 0.0
      %1011 = vmatprep.subr.mxu0 0.0
      %1012 = vmatpush1.msra.mxu0 0.0
      %1013 = vmatprep.subr.mxu0 0.0
      %1014 = vmatpush1.msra.mxu0 0.0
      %1015 = vmatprep.subr.mxu0 0.0
      %1016 = vmatpush1.msra.mxu0 0.0
      %1017 = vmatprep.subr.mxu0 0.0
      %1018 = vmatpush1.msra.mxu0 0.0
      %1019 = vmatprep.subr.mxu0 0.0
      %1020 = vmatpush1.msra.mxu0 0.0
      %1021 = vmatprep.subr.mxu0 0.0
      %1022 = vmatpush1.msra.mxu0 0.0
      %1023 = vmatprep.subr.mxu0 0.0
      %1024 = vmatpush1.msra.mxu0 0.0
      %1025 = vmatprep.subr.mxu0 0.0
      %1026 = vmatpush1.msra.mxu0 0.0
      %1027 = vmatprep.subr.mxu0 0.0
      %1028 = vmatpush1.msra.mxu0 0.0
      %1029 = vmatprep.subr.mxu0 0.0
      %1030 = vmatpush1.msra.mxu0 0.0
      %1031 = vmatprep.subr.mxu0 0.0
      %1032 = vmatpush1.msra.mxu0 0.0
      %1033 = vmatprep.subr.mxu0 0.0
      %1034 = vmatpush1.msra.mxu0 0.0
      %1035 = vmatprep.subr.mxu0 0.0
      %1036 = vmatpush1.msra.mxu0 0.0
      %1037 = vmatprep.subr.mxu0 0.0
      %1038 = vmatpush1.msra.mxu0 0.0
      %1039 = vmatprep.subr.mxu0 0.0
      %1040 = vmatpush1.msra.mxu0 0.0
      %1041 = vmatprep.subr.mxu0 0.0
      %1042 = vmatpush1.msra.mxu0 0.0
      %1043 = vmatprep.subr.mxu0 0.0
      %1044 = vmatpush1.msra.mxu0 0.0
      %1045 = vmatprep.subr.mxu0 0.0
      %1046 = vmatpush1.msra.mxu0 0.0
      %1047 = vmatprep.subr.mxu0 0.0
      %1048 = vmatpush1.msra.mxu0 0.0
      %1049 = vmatprep.subr.mxu0 0.0
      %1050 = vmatpush1.msra.mxu0 0.0
      %1051 = vmatprep.subr.mxu0 0.0
      %1052 = vmatpush1.msra.mxu0 0.0
      %1053 = vmatprep.subr.mxu0 0.0
      %1054 = vmatpush1.msra.mxu0 0.0
      %1055 = vmatprep.subr.mxu0 0.0
      %1056 = vmatpush1.msra.mxu0 0.0
      %1057 = vmatprep.subr.mxu0 0.0
      %1058 = vmatpush1.msra.mxu0 0.0
      %1059 = vmatprep.subr.mxu0 0.0
      %1060 = vmatpush1.msra.mxu0 0.0
      %1061 = vmatprep.subr.mxu0 0.0
      %1062 = vmatpush1.msra.mxu0 0.0
      %1063 = vmatprep.mubr.f32.mxu0 0.0
      %1064 = vmatmul.mubr.f32.gmra.mrb[0].mxu0 %v920
      %v1065 = vpop.f32.mrb[0].mxu0
      %v1066 = vadd.f32 0.0, %v1065
      %v1067 = vpop.f32.mrb[0].mxu0
      %1068 = vdwg.mxu0
      %v1069 = vadd.f32 %v900, %v995
      %v1070 = vadd.f32 %v901, %v997
      %v1071 = vadd.f32 %v902, %v1066
      %v1072 = vld [vmem:[%s232] sm:$0xff]
      %v1073 = vld [vmem:[%s232 + $0x8] sm:$0xf]
      %s1074 = scalar_lea.vmem %s0, 40
      %v1075 = vld [vmem:[%s1074] sm:$0xff]
      %v1078 = vcombine.high %v1072, %v1072
      %1079 = vrot.lane.b32.xlu0 %v1072, 108
      %v1080 = vpop.permute.xlu0 %1079
      %1081 = vrot.lane.b32.xlu0 %v1078, 108
      %v1082 = vpop.permute.xlu0 %1081
      %1083 = vrot.lane.b32.xlu0 %v1073, 108
      %v1084 = vpop.permute.xlu0 %1083
      %vm1085 = vcmask 883712
      %v1086 = vsel %vm1085, %v1080, %v1082
      %v1087 = vsel %vm1085, %v1082, %v1084
      %v1089 = vsel %vm263, %v1075, 0
      %v1091 = vsel %vm267, %v1086, 0
      %v1093 = vsel %vm267, %v1087, 0
      %v1095 = vsel %vm267, %v1084, 0
      %1097 = vmatprep.subr.mxu0 %v1093
      %1098 = vmatpush1.msra.mxu0 %v1091
      %1099 = vmatprep.subr.mxu0 0.0
      %1100 = vmatpush1.msra.mxu0 0.0
      %1101 = vmatprep.subr.mxu0 0.0
      %1102 = vmatpush1.msra.mxu0 0.0
      %1103 = vmatprep.subr.mxu0 0.0
      %1104 = vmatpush1.msra.mxu0 0.0
      %1105 = vmatprep.subr.mxu0 0.0
      %1106 = vmatpush1.msra.mxu0 0.0
      %1107 = vmatprep.subr.mxu0 0.0
      %1108 = vmatpush1.msra.mxu0 0.0
      %1109 = vmatprep.subr.mxu0 0.0
      %1110 = vmatpush1.msra.mxu0 0.0
      %1111 = vmatprep.subr.mxu0 0.0
      %1112 = vmatpush1.msra.mxu0 0.0
      %1113 = vmatprep.subr.mxu0 0.0
      %1114 = vmatpush1.msra.mxu0 0.0
      %1115 = vmatprep.subr.mxu0 0.0
      %1116 = vmatpush1.msra.mxu0 0.0
      %1117 = vmatprep.subr.mxu0 0.0
      %1118 = vmatpush1.msra.mxu0 0.0
      %1119 = vmatprep.subr.mxu0 0.0
      %1120 = vmatpush1.msra.mxu0 0.0
      %1121 = vmatprep.subr.mxu0 0.0
      %1122 = vmatpush1.msra.mxu0 0.0
      %1123 = vmatprep.subr.mxu0 0.0
      %1124 = vmatpush1.msra.mxu0 0.0
      %1125 = vmatprep.subr.mxu0 0.0
      %1126 = vmatpush1.msra.mxu0 0.0
      %1127 = vmatprep.subr.mxu0 0.0
      %1128 = vmatpush1.msra.mxu0 0.0
      %1129 = vmatprep.subr.mxu0 0.0
      %1130 = vmatpush1.msra.mxu0 0.0
      %1131 = vmatprep.subr.mxu0 0.0
      %1132 = vmatpush1.msra.mxu0 0.0
      %1133 = vmatprep.subr.mxu0 0.0
      %1134 = vmatpush1.msra.mxu0 0.0
      %1135 = vmatprep.subr.mxu0 0.0
      %1136 = vmatpush1.msra.mxu0 0.0
      %1137 = vmatprep.subr.mxu0 0.0
      %1138 = vmatpush1.msra.mxu0 0.0
      %1139 = vmatprep.subr.mxu0 0.0
      %1140 = vmatpush1.msra.mxu0 0.0
      %1141 = vmatprep.subr.mxu0 0.0
      %1142 = vmatpush1.msra.mxu0 0.0
      %1143 = vmatprep.subr.mxu0 0.0
      %1144 = vmatpush1.msra.mxu0 0.0
      %1145 = vmatprep.subr.mxu0 0.0
      %1146 = vmatpush1.msra.mxu0 0.0
      %1147 = vmatprep.subr.mxu0 0.0
      %1148 = vmatpush1.msra.mxu0 0.0
      %1149 = vmatprep.subr.mxu0 0.0
      %1150 = vmatpush1.msra.mxu0 0.0
      %1151 = vmatprep.subr.mxu0 0.0
      %1152 = vmatpush1.msra.mxu0 0.0
      %1153 = vmatprep.subr.mxu0 0.0
      %1154 = vmatpush1.msra.mxu0 0.0
      %1155 = vmatprep.subr.mxu0 0.0
      %1156 = vmatpush1.msra.mxu0 0.0
      %1157 = vmatprep.subr.mxu0 0.0
      %1158 = vmatpush1.msra.mxu0 0.0
      %1159 = vmatprep.subr.mxu0 0.0
      %1160 = vmatpush1.msra.mxu0 0.0
      %1161 = vmatprep.mubr.f32.mxu0 0.0
      %1162 = vmatmul.mubr.f32.gmra.mrb[0].mxu0 %v1089
      %v1163 = vpop.f32.mrb[0].mxu0
      %v1164 = vadd.f32 0.0, %v1163
      %v1165 = vpop.f32.mrb[0].mxu0
      %v1166 = vadd.f32 0.0, %v1165
      %1167 = vdwg.mxu0
      %1168 = vmatprep.subr.mxu0 0.0
      %1169 = vmatpush1.msra.mxu0 %v1095
      %1170 = vmatprep.subr.mxu0 0.0
      %1171 = vmatpush1.msra.mxu0 0.0
      %1172 = vmatprep.subr.mxu0 0.0
      %1173 = vmatpush1.msra.mxu0 0.0
      %1174 = vmatprep.subr.mxu0 0.0
      %1175 = vmatpush1.msra.mxu0 0.0
      %1176 = vmatprep.subr.mxu0 0.0
      %1177 = vmatpush1.msra.mxu0 0.0
      %1178 = vmatprep.subr.mxu0 0.0
      %1179 = vmatpush1.msra.mxu0 0.0
      %1180 = vmatprep.subr.mxu0 0.0
      %1181 = vmatpush1.msra.mxu0 0.0
      %1182 = vmatprep.subr.mxu0 0.0
      %1183 = vmatpush1.msra.mxu0 0.0
      %1184 = vmatprep.subr.mxu0 0.0
      %1185 = vmatpush1.msra.mxu0 0.0
      %1186 = vmatprep.subr.mxu0 0.0
      %1187 = vmatpush1.msra.mxu0 0.0
      %1188 = vmatprep.subr.mxu0 0.0
      %1189 = vmatpush1.msra.mxu0 0.0
      %1190 = vmatprep.subr.mxu0 0.0
      %1191 = vmatpush1.msra.mxu0 0.0
      %1192 = vmatprep.subr.mxu0 0.0
      %1193 = vmatpush1.msra.mxu0 0.0
      %1194 = vmatprep.subr.mxu0 0.0
      %1195 = vmatpush1.msra.mxu0 0.0
      %1196 = vmatprep.subr.mxu0 0.0
      %1197 = vmatpush1.msra.mxu0 0.0
      %1198 = vmatprep.subr.mxu0 0.0
      %1199 = vmatpush1.msra.mxu0 0.0
      %1200 = vmatprep.subr.mxu0 0.0
      %1201 = vmatpush1.msra.mxu0 0.0
      %1202 = vmatprep.subr.mxu0 0.0
      %1203 = vmatpush1.msra.mxu0 0.0
      %1204 = vmatprep.subr.mxu0 0.0
      %1205 = vmatpush1.msra.mxu0 0.0
      %1206 = vmatprep.subr.mxu0 0.0
      %1207 = vmatpush1.msra.mxu0 0.0
      %1208 = vmatprep.subr.mxu0 0.0
      %1209 = vmatpush1.msra.mxu0 0.0
      %1210 = vmatprep.subr.mxu0 0.0
      %1211 = vmatpush1.msra.mxu0 0.0
      %1212 = vmatprep.subr.mxu0 0.0
      %1213 = vmatpush1.msra.mxu0 0.0
      %1214 = vmatprep.subr.mxu0 0.0
      %1215 = vmatpush1.msra.mxu0 0.0
      %1216 = vmatprep.subr.mxu0 0.0
      %1217 = vmatpush1.msra.mxu0 0.0
      %1218 = vmatprep.subr.mxu0 0.0
      %1219 = vmatpush1.msra.mxu0 0.0
      %1220 = vmatprep.subr.mxu0 0.0
      %1221 = vmatpush1.msra.mxu0 0.0
      %1222 = vmatprep.subr.mxu0 0.0
      %1223 = vmatpush1.msra.mxu0 0.0
      %1224 = vmatprep.subr.mxu0 0.0
      %1225 = vmatpush1.msra.mxu0 0.0
      %1226 = vmatprep.subr.mxu0 0.0
      %1227 = vmatpush1.msra.mxu0 0.0
      %1228 = vmatprep.subr.mxu0 0.0
      %1229 = vmatpush1.msra.mxu0 0.0
      %1230 = vmatprep.subr.mxu0 0.0
      %1231 = vmatpush1.msra.mxu0 0.0
      %1232 = vmatprep.mubr.f32.mxu0 0.0
      %1233 = vmatmul.mubr.f32.gmra.mrb[0].mxu0 %v1089
      %v1234 = vpop.f32.mrb[0].mxu0
      %v1235 = vadd.f32 0.0, %v1234
      %v1236 = vpop.f32.mrb[0].mxu0
      %1237 = vdwg.mxu0
      %v1238 = vadd.f32 %v1069, %v1164
      %v1239 = vadd.f32 %v1070, %v1166
      %v1240 = vadd.f32 %v1071, %v1235
      %v1241 = vld [vmem:[%s232] sm:$0xff]
      %v1242 = vld [vmem:[%s232 + $0x8] sm:$0xf]
      %s1243 = scalar_lea.vmem %s0, 48
      %v1244 = vld [vmem:[%s1243] sm:$0xff]
      %v1247 = vcombine.high %v1241, %v1241
      %1248 = vrot.lane.b32.xlu0 %v1241, 92
      %v1249 = vpop.permute.xlu0 %1248
      %1250 = vrot.lane.b32.xlu0 %v1247, 92
      %v1251 = vpop.permute.xlu0 %1250
      %1252 = vrot.lane.b32.xlu0 %v1242, 92
      %v1253 = vpop.permute.xlu0 %1252
      %vm1254 = vcmask 752640
      %v1255 = vsel %vm1254, %v1249, %v1251
      %v1256 = vsel %vm1254, %v1251, %v1253
      %v1258 = vsel %vm263, %v1244, 0
      %v1260 = vsel %vm267, %v1255, 0
      %v1262 = vsel %vm267, %v1256, 0
      %v1264 = vsel %vm267, %v1253, 0
      %1266 = vmatprep.subr.mxu0 %v1262
      %1267 = vmatpush1.msra.mxu0 %v1260
      %1268 = vmatprep.subr.mxu0 0.0
      %1269 = vmatpush1.msra.mxu0 0.0
      %1270 = vmatprep.subr.mxu0 0.0
      %1271 = vmatpush1.msra.mxu0 0.0
      %1272 = vmatprep.subr.mxu0 0.0
      %1273 = vmatpush1.msra.mxu0 0.0
      %1274 = vmatprep.subr.mxu0 0.0
      %1275 = vmatpush1.msra.mxu0 0.0
      %1276 = vmatprep.subr.mxu0 0.0
      %1277 = vmatpush1.msra.mxu0 0.0
      %1278 = vmatprep.subr.mxu0 0.0
      %1279 = vmatpush1.msra.mxu0 0.0
      %1280 = vmatprep.subr.mxu0 0.0
      %1281 = vmatpush1.msra.mxu0 0.0
      %1282 = vmatprep.subr.mxu0 0.0
      %1283 = vmatpush1.msra.mxu0 0.0
      %1284 = vmatprep.subr.mxu0 0.0
      %1285 = vmatpush1.msra.mxu0 0.0
      %1286 = vmatprep.subr.mxu0 0.0
      %1287 = vmatpush1.msra.mxu0 0.0
      %1288 = vmatprep.subr.mxu0 0.0
      %1289 = vmatpush1.msra.mxu0 0.0
      %1290 = vmatprep.subr.mxu0 0.0
      %1291 = vmatpush1.msra.mxu0 0.0
      %1292 = vmatprep.subr.mxu0 0.0
      %1293 = vmatpush1.msra.mxu0 0.0
      %1294 = vmatprep.subr.mxu0 0.0
      %1295 = vmatpush1.msra.mxu0 0.0
      %1296 = vmatprep.subr.mxu0 0.0
      %1297 = vmatpush1.msra.mxu0 0.0
      %1298 = vmatprep.subr.mxu0 0.0
      %1299 = vmatpush1.msra.mxu0 0.0
      %1300 = vmatprep.subr.mxu0 0.0
      %1301 = vmatpush1.msra.mxu0 0.0
      %1302 = vmatprep.subr.mxu0 0.0
      %1303 = vmatpush1.msra.mxu0 0.0
      %1304 = vmatprep.subr.mxu0 0.0
      %1305 = vmatpush1.msra.mxu0 0.0
      %1306 = vmatprep.subr.mxu0 0.0
      %1307 = vmatpush1.msra.mxu0 0.0
      %1308 = vmatprep.subr.mxu0 0.0
      %1309 = vmatpush1.msra.mxu0 0.0
      %1310 = vmatprep.subr.mxu0 0.0
      %1311 = vmatpush1.msra.mxu0 0.0
      %1312 = vmatprep.subr.mxu0 0.0
      %1313 = vmatpush1.msra.mxu0 0.0
      %1314 = vmatprep.subr.mxu0 0.0
      %1315 = vmatpush1.msra.mxu0 0.0
      %1316 = vmatprep.subr.mxu0 0.0
      %1317 = vmatpush1.msra.mxu0 0.0
      %1318 = vmatprep.subr.mxu0 0.0
      %1319 = vmatpush1.msra.mxu0 0.0
      %1320 = vmatprep.subr.mxu0 0.0
      %1321 = vmatpush1.msra.mxu0 0.0
      %1322 = vmatprep.subr.mxu0 0.0
      %1323 = vmatpush1.msra.mxu0 0.0
      %1324 = vmatprep.subr.mxu0 0.0
      %1325 = vmatpush1.msra.mxu0 0.0
      %1326 = vmatprep.subr.mxu0 0.0
      %1327 = vmatpush1.msra.mxu0 0.0
      %1328 = vmatprep.subr.mxu0 0.0
      %1329 = vmatpush1.msra.mxu0 0.0
      %1330 = vmatprep.mubr.f32.mxu0 0.0
      %1331 = vmatmul.mubr.f32.gmra.mrb[0].mxu0 %v1258
      %v1332 = vpop.f32.mrb[0].mxu0
      %v1333 = vadd.f32 0.0, %v1332
      %v1334 = vpop.f32.mrb[0].mxu0
      %v1335 = vadd.f32 0.0, %v1334
      %1336 = vdwg.mxu0
      %1337 = vmatprep.subr.mxu0 0.0
      %1338 = vmatpush1.msra.mxu0 %v1264
      %1339 = vmatprep.subr.mxu0 0.0
      %1340 = vmatpush1.msra.mxu0 0.0
      %1341 = vmatprep.subr.mxu0 0.0
      %1342 = vmatpush1.msra.mxu0 0.0
      %1343 = vmatprep.subr.mxu0 0.0
      %1344 = vmatpush1.msra.mxu0 0.0
      %1345 = vmatprep.subr.mxu0 0.0
      %1346 = vmatpush1.msra.mxu0 0.0
      %1347 = vmatprep.subr.mxu0 0.0
      %1348 = vmatpush1.msra.mxu0 0.0
      %1349 = vmatprep.subr.mxu0 0.0
      %1350 = vmatpush1.msra.mxu0 0.0
      %1351 = vmatprep.subr.mxu0 0.0
      %1352 = vmatpush1.msra.mxu0 0.0
      %1353 = vmatprep.subr.mxu0 0.0
      %1354 = vmatpush1.msra.mxu0 0.0
      %1355 = vmatprep.subr.mxu0 0.0
      %1356 = vmatpush1.msra.mxu0 0.0
      %1357 = vmatprep.subr.mxu0 0.0
      %1358 = vmatpush1.msra.mxu0 0.0
      %1359 = vmatprep.subr.mxu0 0.0
      %1360 = vmatpush1.msra.mxu0 0.0
      %1361 = vmatprep.subr.mxu0 0.0
      %1362 = vmatpush1.msra.mxu0 0.0
      %1363 = vmatprep.subr.mxu0 0.0
      %1364 = vmatpush1.msra.mxu0 0.0
      %1365 = vmatprep.subr.mxu0 0.0
      %1366 = vmatpush1.msra.mxu0 0.0
      %1367 = vmatprep.subr.mxu0 0.0
      %1368 = vmatpush1.msra.mxu0 0.0
      %1369 = vmatprep.subr.mxu0 0.0
      %1370 = vmatpush1.msra.mxu0 0.0
      %1371 = vmatprep.subr.mxu0 0.0
      %1372 = vmatpush1.msra.mxu0 0.0
      %1373 = vmatprep.subr.mxu0 0.0
      %1374 = vmatpush1.msra.mxu0 0.0
      %1375 = vmatprep.subr.mxu0 0.0
      %1376 = vmatpush1.msra.mxu0 0.0
      %1377 = vmatprep.subr.mxu0 0.0
      %1378 = vmatpush1.msra.mxu0 0.0
      %1379 = vmatprep.subr.mxu0 0.0
      %1380 = vmatpush1.msra.mxu0 0.0
      %1381 = vmatprep.subr.mxu0 0.0
      %1382 = vmatpush1.msra.mxu0 0.0
      %1383 = vmatprep.subr.mxu0 0.0
      %1384 = vmatpush1.msra.mxu0 0.0
      %1385 = vmatprep.subr.mxu0 0.0
      %1386 = vmatpush1.msra.mxu0 0.0
      %1387 = vmatprep.subr.mxu0 0.0
      %1388 = vmatpush1.msra.mxu0 0.0
      %1389 = vmatprep.subr.mxu0 0.0
      %1390 = vmatpush1.msra.mxu0 0.0
      %1391 = vmatprep.subr.mxu0 0.0
      %1392 = vmatpush1.msra.mxu0 0.0
      %1393 = vmatprep.subr.mxu0 0.0
      %1394 = vmatpush1.msra.mxu0 0.0
      %1395 = vmatprep.subr.mxu0 0.0
      %1396 = vmatpush1.msra.mxu0 0.0
      %1397 = vmatprep.subr.mxu0 0.0
      %1398 = vmatpush1.msra.mxu0 0.0
      %1399 = vmatprep.subr.mxu0 0.0
      %1400 = vmatpush1.msra.mxu0 0.0
      %1401 = vmatprep.mubr.f32.mxu0 0.0
      %1402 = vmatmul.mubr.f32.gmra.mrb[0].mxu0 %v1258
      %v1403 = vpop.f32.mrb[0].mxu0
      %v1404 = vadd.f32 0.0, %v1403
      %v1405 = vpop.f32.mrb[0].mxu0
      %1406 = vdwg.mxu0
      %v1407 = vadd.f32 %v1238, %v1333
      %v1408 = vadd.f32 %v1239, %v1335
      %v1409 = vadd.f32 %v1240, %v1404
      %v1410 = vld [vmem:[%s232] sm:$0xff]
      %v1411 = vld [vmem:[%s232 + $0x8] sm:$0xf]
      %s1412 = scalar_lea.vmem %s0, 56
      %v1413 = vld [vmem:[%s1412] sm:$0xff]
      %v1416 = vcombine.high %v1410, %v1410
      %1417 = vrot.lane.b32.xlu0 %v1410, 91
      %v1418 = vpop.permute.xlu0 %1417
      %1419 = vrot.lane.b32.xlu0 %v1416, 91
      %v1420 = vpop.permute.xlu0 %1419
      %1421 = vrot.lane.b32.xlu0 %v1411, 91
      %v1422 = vpop.permute.xlu0 %1421
      %vm1423 = vcmask 744448
      %v1424 = vsel %vm1423, %v1418, %v1420
      %v1425 = vsel %vm1423, %v1420, %v1422
      %v1427 = vsel %vm263, %v1413, 0
      %v1429 = vsel %vm267, %v1424, 0
      %v1431 = vsel %vm267, %v1425, 0
      %v1433 = vsel %vm267, %v1422, 0
      %1435 = vmatprep.subr.mxu0 %v1431
      %1436 = vmatpush1.msra.mxu0 %v1429
      %1437 = vmatprep.subr.mxu0 0.0
      %1438 = vmatpush1.msra.mxu0 0.0
      %1439 = vmatprep.subr.mxu0 0.0
      %1440 = vmatpush1.msra.mxu0 0.0
      %1441 = vmatprep.subr.mxu0 0.0
      %1442 = vmatpush1.msra.mxu0 0.0
      %1443 = vmatprep.subr.mxu0 0.0
      %1444 = vmatpush1.msra.mxu0 0.0
      %1445 = vmatprep.subr.mxu0 0.0
      %1446 = vmatpush1.msra.mxu0 0.0
      %1447 = vmatprep.subr.mxu0 0.0
      %1448 = vmatpush1.msra.mxu0 0.0
      %1449 = vmatprep.subr.mxu0 0.0
      %1450 = vmatpush1.msra.mxu0 0.0
      %1451 = vmatprep.subr.mxu0 0.0
      %1452 = vmatpush1.msra.mxu0 0.0
      %1453 = vmatprep.subr.mxu0 0.0
      %1454 = vmatpush1.msra.mxu0 0.0
      %1455 = vmatprep.subr.mxu0 0.0
      %1456 = vmatpush1.msra.mxu0 0.0
      %1457 = vmatprep.subr.mxu0 0.0
      %1458 = vmatpush1.msra.mxu0 0.0
      %1459 = vmatprep.subr.mxu0 0.0
      %1460 = vmatpush1.msra.mxu0 0.0
      %1461 = vmatprep.subr.mxu0 0.0
      %1462 = vmatpush1.msra.mxu0 0.0
      %1463 = vmatprep.subr.mxu0 0.0
      %1464 = vmatpush1.msra.mxu0 0.0
      %1465 = vmatprep.subr.mxu0 0.0
      %1466 = vmatpush1.msra.mxu0 0.0
      %1467 = vmatprep.subr.mxu0 0.0
      %1468 = vmatpush1.msra.mxu0 0.0
      %1469 = vmatprep.subr.mxu0 0.0
      %1470 = vmatpush1.msra.mxu0 0.0
      %1471 = vmatprep.subr.mxu0 0.0
      %1472 = vmatpush1.msra.mxu0 0.0
      %1473 = vmatprep.subr.mxu0 0.0
      %1474 = vmatpush1.msra.mxu0 0.0
      %1475 = vmatprep.subr.mxu0 0.0
      %1476 = vmatpush1.msra.mxu0 0.0
      %1477 = vmatprep.subr.mxu0 0.0
      %1478 = vmatpush1.msra.mxu0 0.0
      %1479 = vmatprep.subr.mxu0 0.0
      %1480 = vmatpush1.msra.mxu0 0.0
      %1481 = vmatprep.subr.mxu0 0.0
      %1482 = vmatpush1.msra.mxu0 0.0
      %1483 = vmatprep.subr.mxu0 0.0
      %1484 = vmatpush1.msra.mxu0 0.0
      %1485 = vmatprep.subr.mxu0 0.0
      %1486 = vmatpush1.msra.mxu0 0.0
      %1487 = vmatprep.subr.mxu0 0.0
      %1488 = vmatpush1.msra.mxu0 0.0
      %1489 = vmatprep.subr.mxu0 0.0
      %1490 = vmatpush1.msra.mxu0 0.0
      %1491 = vmatprep.subr.mxu0 0.0
      %1492 = vmatpush1.msra.mxu0 0.0
      %1493 = vmatprep.subr.mxu0 0.0
      %1494 = vmatpush1.msra.mxu0 0.0
      %1495 = vmatprep.subr.mxu0 0.0
      %1496 = vmatpush1.msra.mxu0 0.0
      %1497 = vmatprep.subr.mxu0 0.0
      %1498 = vmatpush1.msra.mxu0 0.0
      %1499 = vmatprep.mubr.f32.mxu0 0.0
      %1500 = vmatmul.mubr.f32.gmra.mrb[0].mxu0 %v1427
      %v1501 = vpop.f32.mrb[0].mxu0
      %v1502 = vadd.f32 0.0, %v1501
      %v1503 = vpop.f32.mrb[0].mxu0
      %v1504 = vadd.f32 0.0, %v1503
      %1505 = vdwg.mxu0
      %1506 = vmatprep.subr.mxu0 0.0
      %1507 = vmatpush1.msra.mxu0 %v1433
      %1508 = vmatprep.subr.mxu0 0.0
      %1509 = vmatpush1.msra.mxu0 0.0
      %1510 = vmatprep.subr.mxu0 0.0
      %1511 = vmatpush1.msra.mxu0 0.0
      %1512 = vmatprep.subr.mxu0 0.0
      %1513 = vmatpush1.msra.mxu0 0.0
      %1514 = vmatprep.subr.mxu0 0.0
      %1515 = vmatpush1.msra.mxu0 0.0
      %1516 = vmatprep.subr.mxu0 0.0
      %1517 = vmatpush1.msra.mxu0 0.0
      %1518 = vmatprep.subr.mxu0 0.0
      %1519 = vmatpush1.msra.mxu0 0.0
      %1520 = vmatprep.subr.mxu0 0.0
      %1521 = vmatpush1.msra.mxu0 0.0
      %1522 = vmatprep.subr.mxu0 0.0
      %1523 = vmatpush1.msra.mxu0 0.0
      %1524 = vmatprep.subr.mxu0 0.0
      %1525 = vmatpush1.msra.mxu0 0.0
      %1526 = vmatprep.subr.mxu0 0.0
      %1527 = vmatpush1.msra.mxu0 0.0
      %1528 = vmatprep.subr.mxu0 0.0
      %1529 = vmatpush1.msra.mxu0 0.0
      %1530 = vmatprep.subr.mxu0 0.0
      %1531 = vmatpush1.msra.mxu0 0.0
      %1532 = vmatprep.subr.mxu0 0.0
      %1533 = vmatpush1.msra.mxu0 0.0
      %1534 = vmatprep.subr.mxu0 0.0
      %1535 = vmatpush1.msra.mxu0 0.0
      %1536 = vmatprep.subr.mxu0 0.0
      %1537 = vmatpush1.msra.mxu0 0.0
      %1538 = vmatprep.subr.mxu0 0.0
      %1539 = vmatpush1.msra.mxu0 0.0
      %1540 = vmatprep.subr.mxu0 0.0
      %1541 = vmatpush1.msra.mxu0 0.0
      %1542 = vmatprep.subr.mxu0 0.0
      %1543 = vmatpush1.msra.mxu0 0.0
      %1544 = vmatprep.subr.mxu0 0.0
      %1545 = vmatpush1.msra.mxu0 0.0
      %1546 = vmatprep.subr.mxu0 0.0
      %1547 = vmatpush1.msra.mxu0 0.0
      %1548 = vmatprep.subr.mxu0 0.0
      %1549 = vmatpush1.msra.mxu0 0.0
      %1550 = vmatprep.subr.mxu0 0.0
      %1551 = vmatpush1.msra.mxu0 0.0
      %1552 = vmatprep.subr.mxu0 0.0
      %1553 = vmatpush1.msra.mxu0 0.0
      %1554 = vmatprep.subr.mxu0 0.0
      %1555 = vmatpush1.msra.mxu0 0.0
      %1556 = vmatprep.subr.mxu0 0.0
      %1557 = vmatpush1.msra.mxu0 0.0
      %1558 = vmatprep.subr.mxu0 0.0
      %1559 = vmatpush1.msra.mxu0 0.0
      %1560 = vmatprep.subr.mxu0 0.0
      %1561 = vmatpush1.msra.mxu0 0.0
      %1562 = vmatprep.subr.mxu0 0.0
      %1563 = vmatpush1.msra.mxu0 0.0
      %1564 = vmatprep.subr.mxu0 0.0
      %1565 = vmatpush1.msra.mxu0 0.0
      %1566 = vmatprep.subr.mxu0 0.0
      %1567 = vmatpush1.msra.mxu0 0.0
      %1568 = vmatprep.subr.mxu0 0.0
      %1569 = vmatpush1.msra.mxu0 0.0
      %1570 = vmatprep.mubr.f32.mxu0 0.0
      %1571 = vmatmul.mubr.f32.gmra.mrb[0].mxu0 %v1427
      %v1572 = vpop.f32.mrb[0].mxu0
      %v1573 = vadd.f32 0.0, %v1572
      %v1574 = vpop.f32.mrb[0].mxu0
      %1575 = vdwg.mxu0
      %v1576 = vadd.f32 %v1407, %v1502
      %v1577 = vadd.f32 %v1408, %v1504
      %v1578 = vadd.f32 %v1409, %v1573
      %v1579 = vld [vmem:[%s232] sm:$0xff]
      %v1580 = vld [vmem:[%s232 + $0x8] sm:$0xf]
      %s1581 = scalar_lea.vmem %s0, 64
      %v1582 = vld [vmem:[%s1581] sm:$0xff]
      %v1585 = vcombine.high %v1579, %v1579
      %1586 = vrot.lane.b32.xlu0 %v1579, 90
      %v1587 = vpop.permute.xlu0 %1586
      %1588 = vrot.lane.b32.xlu0 %v1585, 90
      %v1589 = vpop.permute.xlu0 %1588
      %1590 = vrot.lane.b32.xlu0 %v1580, 90
      %v1591 = vpop.permute.xlu0 %1590
      %vm1592 = vcmask 736256
      %v1593 = vsel %vm1592, %v1587, %v1589
      %v1594 = vsel %vm1592, %v1589, %v1591
      %v1596 = vsel %vm263, %v1582, 0
      %v1598 = vsel %vm267, %v1593, 0
      %v1600 = vsel %vm267, %v1594, 0
      %v1602 = vsel %vm267, %v1591, 0
      %1604 = vmatprep.subr.mxu0 %v1600
      %1605 = vmatpush1.msra.mxu0 %v1598
      %1606 = vmatprep.subr.mxu0 0.0
      %1607 = vmatpush1.msra.mxu0 0.0
      %1608 = vmatprep.subr.mxu0 0.0
      %1609 = vmatpush1.msra.mxu0 0.0
      %1610 = vmatprep.subr.mxu0 0.0
      %1611 = vmatpush1.msra.mxu0 0.0
      %1612 = vmatprep.subr.mxu0 0.0
      %1613 = vmatpush1.msra.mxu0 0.0
      %1614 = vmatprep.subr.mxu0 0.0
      %1615 = vmatpush1.msra.mxu0 0.0
      %1616 = vmatprep.subr.mxu0 0.0
      %1617 = vmatpush1.msra.mxu0 0.0
      %1618 = vmatprep.subr.mxu0 0.0
      %1619 = vmatpush1.msra.mxu0 0.0
      %1620 = vmatprep.subr.mxu0 0.0
      %1621 = vmatpush1.msra.mxu0 0.0
      %1622 = vmatprep.subr.mxu0 0.0
      %1623 = vmatpush1.msra.mxu0 0.0
      %1624 = vmatprep.subr.mxu0 0.0
      %1625 = vmatpush1.msra.mxu0 0.0
      %1626 = vmatprep.subr.mxu0 0.0
      %1627 = vmatpush1.msra.mxu0 0.0
      %1628 = vmatprep.subr.mxu0 0.0
      %1629 = vmatpush1.msra.mxu0 0.0
      %1630 = vmatprep.subr.mxu0 0.0
      %1631 = vmatpush1.msra.mxu0 0.0
      %1632 = vmatprep.subr.mxu0 0.0
      %1633 = vmatpush1.msra.mxu0 0.0
      %1634 = vmatprep.subr.mxu0 0.0
      %1635 = vmatpush1.msra.mxu0 0.0
      %1636 = vmatprep.subr.mxu0 0.0
      %1637 = vmatpush1.msra.mxu0 0.0
      %1638 = vmatprep.subr.mxu0 0.0
      %1639 = vmatpush1.msra.mxu0 0.0
      %1640 = vmatprep.subr.mxu0 0.0
      %1641 = vmatpush1.msra.mxu0 0.0
      %1642 = vmatprep.subr.mxu0 0.0
      %1643 = vmatpush1.msra.mxu0 0.0
      %1644 = vmatprep.subr.mxu0 0.0
      %1645 = vmatpush1.msra.mxu0 0.0
      %1646 = vmatprep.subr.mxu0 0.0
      %1647 = vmatpush1.msra.mxu0 0.0
      %1648 = vmatprep.subr.mxu0 0.0
      %1649 = vmatpush1.msra.mxu0 0.0
      %1650 = vmatprep.subr.mxu0 0.0
      %1651 = vmatpush1.msra.mxu0 0.0
      %1652 = vmatprep.subr.mxu0 0.0
      %1653 = vmatpush1.msra.mxu0 0.0
      %1654 = vmatprep.subr.mxu0 0.0
      %1655 = vmatpush1.msra.mxu0 0.0
      %1656 = vmatprep.subr.mxu0 0.0
      %1657 = vmatpush1.msra.mxu0 0.0
      %1658 = vmatprep.subr.mxu0 0.0
      %1659 = vmatpush1.msra.mxu0 0.0
      %1660 = vmatprep.subr.mxu0 0.0
      %1661 = vmatpush1.msra.mxu0 0.0
      %1662 = vmatprep.subr.mxu0 0.0
      %1663 = vmatpush1.msra.mxu0 0.0
      %1664 = vmatprep.subr.mxu0 0.0
      %1665 = vmatpush1.msra.mxu0 0.0
      %1666 = vmatprep.subr.mxu0 0.0
      %1667 = vmatpush1.msra.mxu0 0.0
      %1668 = vmatprep.mubr.f32.mxu0 0.0
      %1669 = vmatmul.mubr.f32.gmra.mrb[0].mxu0 %v1596
      %v1670 = vpop.f32.mrb[0].mxu0
      %v1671 = vadd.f32 0.0, %v1670
      %v1672 = vpop.f32.mrb[0].mxu0
      %v1673 = vadd.f32 0.0, %v1672
      %1674 = vdwg.mxu0
      %1675 = vmatprep.subr.mxu0 0.0
      %1676 = vmatpush1.msra.mxu0 %v1602
      %1677 = vmatprep.subr.mxu0 0.0
      %1678 = vmatpush1.msra.mxu0 0.0
      %1679 = vmatprep.subr.mxu0 0.0
      %1680 = vmatpush1.msra.mxu0 0.0
      %1681 = vmatprep.subr.mxu0 0.0
      %1682 = vmatpush1.msra.mxu0 0.0
      %1683 = vmatprep.subr.mxu0 0.0
      %1684 = vmatpush1.msra.mxu0 0.0
      %1685 = vmatprep.subr.mxu0 0.0
      %1686 = vmatpush1.msra.mxu0 0.0
      %1687 = vmatprep.subr.mxu0 0.0
      %1688 = vmatpush1.msra.mxu0 0.0
      %1689 = vmatprep.subr.mxu0 0.0
      %1690 = vmatpush1.msra.mxu0 0.0
      %1691 = vmatprep.subr.mxu0 0.0
      %1692 = vmatpush1.msra.mxu0 0.0
      %1693 = vmatprep.subr.mxu0 0.0
      %1694 = vmatpush1.msra.mxu0 0.0
      %1695 = vmatprep.subr.mxu0 0.0
      %1696 = vmatpush1.msra.mxu0 0.0
      %1697 = vmatprep.subr.mxu0 0.0
      %1698 = vmatpush1.msra.mxu0 0.0
      %1699 = vmatprep.subr.mxu0 0.0
      %1700 = vmatpush1.msra.mxu0 0.0
      %1701 = vmatprep.subr.mxu0 0.0
      %1702 = vmatpush1.msra.mxu0 0.0
      %1703 = vmatprep.subr.mxu0 0.0
      %1704 = vmatpush1.msra.mxu0 0.0
      %1705 = vmatprep.subr.mxu0 0.0
      %1706 = vmatpush1.msra.mxu0 0.0
      %1707 = vmatprep.subr.mxu0 0.0
      %1708 = vmatpush1.msra.mxu0 0.0
      %1709 = vmatprep.subr.mxu0 0.0
      %1710 = vmatpush1.msra.mxu0 0.0
      %1711 = vmatprep.subr.mxu0 0.0
      %1712 = vmatpush1.msra.mxu0 0.0
      %1713 = vmatprep.subr.mxu0 0.0
      %1714 = vmatpush1.msra.mxu0 0.0
      %1715 = vmatprep.subr.mxu0 0.0
      %1716 = vmatpush1.msra.mxu0 0.0
      %1717 = vmatprep.subr.mxu0 0.0
      %1718 = vmatpush1.msra.mxu0 0.0
      %1719 = vmatprep.subr.mxu0 0.0
      %1720 = vmatpush1.msra.mxu0 0.0
      %1721 = vmatprep.subr.mxu0 0.0
      %1722 = vmatpush1.msra.mxu0 0.0
      %1723 = vmatprep.subr.mxu0 0.0
      %1724 = vmatpush1.msra.mxu0 0.0
      %1725 = vmatprep.subr.mxu0 0.0
      %1726 = vmatpush1.msra.mxu0 0.0
      %1727 = vmatprep.subr.mxu0 0.0
      %1728 = vmatpush1.msra.mxu0 0.0
      %1729 = vmatprep.subr.mxu0 0.0
      %1730 = vmatpush1.msra.mxu0 0.0
      %1731 = vmatprep.subr.mxu0 0.0
      %1732 = vmatpush1.msra.mxu0 0.0
      %1733 = vmatprep.subr.mxu0 0.0
      %1734 = vmatpush1.msra.mxu0 0.0
      %1735 = vmatprep.subr.mxu0 0.0
      %1736 = vmatpush1.msra.mxu0 0.0
      %1737 = vmatprep.subr.mxu0 0.0
      %1738 = vmatpush1.msra.mxu0 0.0
      %1739 = vmatprep.mubr.f32.mxu0 0.0
      %1740 = vmatmul.mubr.f32.gmra.mrb[0].mxu0 %v1596
      %v1741 = vpop.f32.mrb[0].mxu0
      %v1742 = vadd.f32 0.0, %v1741
      %v1743 = vpop.f32.mrb[0].mxu0
      %1744 = vdwg.mxu0
      %v1745 = vadd.f32 %v1576, %v1671
      %v1746 = vadd.f32 %v1577, %v1673
      %v1747 = vadd.f32 %v1578, %v1742
      %1748 = vst [vmem:[%s237] sm:$0xff] %v1745
      %1749 = vst [vmem:[%s237 + $0x8] sm:$0xff] %v1746
      %vm1750 = vcmask 261120
      %1751 = vst.msk [vmem:[%s237 + $0x10] sm:$0xff] %vm1750, %v1747
      %v1752 = vld [vmem:[%s2] sm:$0x7]
      %v1754 = vlaneseq
      %v1755 = vshrl.u32 %v1754, 7
      %v1756 = vsub.s32 0, %v1755
      %v1757 = vrot.slane %v1752, %v1756
      %v1758 = vlaneseq
      %v1759 = vshrl.u32 %v1758, 7
      %v1760 = vsub.s32 1, %v1759
      %v1761 = vrot.slane %v1752, %v1760
      %v1762 = vlaneseq
      %v1763 = vshrl.u32 %v1762, 7
      %v1764 = vsub.s32 2, %v1763
      %v1765 = vrot.slane %v1752, %v1764
      %v1769 = vmul.f32 %v1745, %v1757
      %v1770 = vmul.f32 %v1746, %v1761
      %v1771 = vmul.f32 %v1747, %v1765
      %v1772 = vadd.f32 %v1769, %v1770
      %v1773 = vsel %vm1750, %v1771, 0.0
      %v1774 = vadd.f32 %v1772, %v1773
      %1775 = vadd.xlane.f32.xlu0 %v1774
      %v1776 = vpop.xlane.xlu0 %1775
      %vm1777 = vcmask 7168
      %1778 = vst.msk [vmem:[%s241] sm:$0xff] %vm1777, %v1776
      %v1779 = vmul.f32 %v1745, %v1745
      %v1780 = vmul.f32 %v1746, %v1746
      %v1781 = vmul.f32 %v1747, %v1747
      %v1782 = vmul.f32 %v1779, %v1757
      %v1783 = vmul.f32 %v1780, %v1761
      %v1784 = vmul.f32 %v1781, %v1765
      %v1785 = vadd.f32 %v1782, %v1783
      %v1786 = vsel %vm1750, %v1784, 0.0
      %v1787 = vadd.f32 %v1785, %v1786
      %1788 = vadd.xlane.f32.xlu0 %v1787
      %v1789 = vpop.xlane.xlu0 %1788
      %1790 = vst.msk [vmem:[%s245] sm:$0xff] %vm1777, %v1789
      %p1791 = scmp.lt.s32.totalorder %s17, 1
      %s1792 = scalar_select %p1791, %s17, 1
      %s1793 = smul.addr %s1792, 3
      %s1794 = smul.addr %s1793, 8
      %s1795 = scalar_lea.vmem %s3, %s1794
      %p1796 = scmp.lt.s32.totalorder %s17, 1
      %s1797 = scalar_select %p1796, %s17, 1
      %s1798 = smul.addr %s1797, 8
      %s1799 = scalar_lea.vmem %s4, %s1798
      %p1800 = scmp.lt.s32.totalorder %s17, 1
      %s1801 = scalar_select %p1800, %s17, 1
      %s1802 = smul.addr %s1801, 8
      %s1803 = scalar_lea.vmem %s5, %s1802
      // Predicated region
      $region33: #{conv_bn_relu.2} parent=31 // pred_check
        %p1804 = pneg %p103
      $region34: #{conv_bn_relu.2} parent=31 // pred_check_branch
        %1806 = sbr.rel (%p1804) target = $region36
      $region35: #{conv_bn_relu.2} parent=31 // pred_region
        _
      $region36: #{conv_bn_relu.2} parent=31 // pred_fallthru
        _
      // Predicated region
      $region37: #{conv_bn_relu.2} parent=31 // pred_check
        %p1807 = pneg %p129
      $region38: #{conv_bn_relu.2} parent=31 // pred_check_branch
        %1809 = sbr.rel (%p1807) target = $region40
      $region39: #{conv_bn_relu.2} parent=31 // pred_region
        _
      $region40: #{conv_bn_relu.2} parent=31 // pred_fallthru
        _
      // Predicated region
      $region41: #{conv_bn_relu.2} parent=31 // pred_check
        %p1810 = pneg %p155
      $region42: #{conv_bn_relu.2} parent=31 // pred_check_branch
        %1812 = sbr.rel (%p1810) target = $region44
      $region43: #{conv_bn_relu.2} parent=31 // pred_region
        _
      $region44: #{conv_bn_relu.2} parent=31 // pred_fallthru
        _
    $region32: #{conv_bn_relu.2} parent=5 // pred_fallthru
      _
    %p1813 = scmp.le.s32.totalorder 2, %s12
    // Predicated region
    $region45: #{conv_bn_relu.2} parent=5 // pred_check
      %p1814 = pneg %p1813
    $region46: #{conv_bn_relu.2} parent=5 // pred_check_branch
      %1816 = sbr.rel (%p1814) target = $region48
    $region47: #{conv_bn_relu.2} parent=5 // pred_region
      %s1817 = ssub.s32 %s12, 2
      // Predicated region
      $region49: #{conv_bn_relu.2} parent=47 // pred_check
        %p1818 = pneg %p109
      $region50: #{conv_bn_relu.2} parent=47 // pred_check_branch
        %1820 = sbr.rel (%p1818) target = $region52
      $region51: #{conv_bn_relu.2} parent=47 // pred_region
        %p1821 = scmp.lt.s32.totalorder %s18, 1
        %s1822 = scalar_select %p1821, %s18, 1
        %s1823 = smul.addr %s1822, 3
        %s1824 = smul.addr %s1823, 8
        %s1825 = scalar_lea.vmem %s3, %s1824
      $region52: #{conv_bn_relu.2} parent=47 // pred_fallthru
        _
      // Predicated region
      $region53: #{conv_bn_relu.2} parent=47 // pred_check
        %p1826 = pneg %p135
      $region54: #{conv_bn_relu.2} parent=47 // pred_check_branch
        %1828 = sbr.rel (%p1826) target = $region56
      $region55: #{conv_bn_relu.2} parent=47 // pred_region
        %p1829 = scmp.lt.s32.totalorder %s18, 1
        %s1830 = scalar_select %p1829, %s18, 1
        %s1831 = smul.addr %s1830, 8
        %s1832 = scalar_lea.vmem %s4, %s1831
      $region56: #{conv_bn_relu.2} parent=47 // pred_fallthru
        _
      // Predicated region
      $region57: #{conv_bn_relu.2} parent=47 // pred_check
        %p1833 = pneg %p161
      $region58: #{conv_bn_relu.2} parent=47 // pred_check_branch
        %1835 = sbr.rel (%p1833) target = $region60
      $region59: #{conv_bn_relu.2} parent=47 // pred_region
        %p1836 = scmp.lt.s32.totalorder %s18, 1
        %s1837 = scalar_select %p1836, %s18, 1
        %s1838 = smul.addr %s1837, 8
        %s1839 = scalar_lea.vmem %s5, %s1838
      $region60: #{conv_bn_relu.2} parent=47 // pred_fallthru
        _
    $region48: #{conv_bn_relu.2} parent=5 // pred_fallthru
      _
  $region6: #{conv_bn_relu.2} parent=0 // loop_footer
    %s16 = sadd.s32 1, %s12
  $region7: #{conv_bn_relu.2} parent=0 // loop_footer_branch
    %11 = sbr.rel target = $region3
  $region8: #{conv_bn_relu.2} parent=0 // loop_exit
    _

</llo_original>
